<compile_context>
chip_gen: v7x
topology: tpu7x:2x2x1
jax: 0.10.0
libtpu: 0.0.40
codegen_flags: <defaults>
</compile_context>

<pallas_src>
import functools

import jax
import jax.numpy as jnp
from jax.experimental import pallas as pl
from jax.experimental.pallas import tpu as pltpu


# ---------------------------------------------------------------------------
# Fused Pallas kernel: conv3x3 -> BN(train) -> ReLU -> conv3x3 -> BN -> ReLU
# ---------------------------------------------------------------------------
def _double_conv_kernel(x_ref, row_ref, col_ref,
                        w1_ref, g1_ref, beta1_ref,
                        w2_ref, g2_ref, beta2_ref,
                        o_ref,
                        pad1_ref, cols1_ref, pad2_ref, cols2_ref,
                        *, H, W, eps):
    """All tensors use a lane-dense (channels, N*H*W) layout.

    x_ref   : (Cin,  NHW)      f32   input activations
    row_ref : (1,    NHW)      i32   row index of each flat position inside its image
    col_ref : (1,    NHW)      i32   col index of each flat position inside its image
    w*_ref  : (Cout, 9*Cin)    im2col-ordered weights
    g*/beta*: (C,    1)        BatchNorm affine parameters
    o_ref   : (Cout, NHW)      f32   output
    pad*_ref: (C,    NHW+2P)   f32   zero-padded flat scratch (halo)
    cols*_ref: (9*C, NHW)            im2col scratch (one big-K matmul per conv)
    """
    NHW = x_ref.shape[1]
    PAD = W + 1
    row = row_ref[...]
    col = col_ref[...]

    def conv3x3_bn_relu(x_flat, w_ref, gamma_ref, beta_ref, pad_ref, cols_ref):
        cin = x_flat.shape[0]

        # In-kernel zero "same" halo: flat position q lives at pad_ref[:, PAD+q].
        pad_ref[...] = jnp.zeros_like(pad_ref)
        pad_ref[:, PAD:PAD + NHW] = x_flat

        # im2col: tap (ky, kx) reads flat offset (ky-1)*W + (kx-1).  The row/col
        # masks zero every position whose shifted read leaves the image, which
        # also kills row-wrap / cross-image contamination of the flat shift.
        for t in range(9):
            dy, dx = t // 3 - 1, t % 3 - 1
            start = PAD + dy * W + dx
            shifted = pad_ref[:, start:start + NHW]                 # (cin, NHW)
            valid = ((row + dy >= 0) & (row + dy < H) &
                     (col + dx >= 0) & (col + dx < W))              # (1, NHW)
            cols_ref[t * cin:(t + 1) * cin, :] = jnp.where(
                valid, shifted, 0.0).astype(cols_ref.dtype)

        # Single MXU matmul per conv: (Cout, 9*cin) @ (9*cin, NHW), K = 9*cin,
        # N = NHW lanes (128-dense), f32 accumulation.
        y = jnp.dot(w_ref[...], cols_ref[...],
                    preferred_element_type=jnp.float32)             # (Cout, NHW)

        # Fused training-mode BatchNorm (+affine) + ReLU epilogue.  The lane
        # axis is exactly the BN reduction set (all N*H*W positions).
        mean = jnp.mean(y, axis=1, keepdims=True)                   # (Cout, 1)
        var = jnp.mean(jnp.square(y - mean), axis=1, keepdims=True)  # biased var
        scale = gamma_ref[...] * jax.lax.rsqrt(var + eps)
        shift = beta_ref[...] - mean * scale
        return jnp.maximum(y * scale + shift, 0.0)

    z1 = conv3x3_bn_relu(x_ref[...].astype(jnp.float32),
                         w1_ref, g1_ref, beta1_ref, pad1_ref, cols1_ref)
    z2 = conv3x3_bn_relu(z1, w2_ref, g2_ref, beta2_ref, pad2_ref, cols2_ref)
    o_ref[...] = z2.astype(o_ref.dtype)


# ---------------------------------------------------------------------------
# Wrapper: layout plumbing (tiny tensors) + the single fused pallas_call
# ---------------------------------------------------------------------------
def double_conv_forward(x_nchw, params, *, eps=1e-5, compute_dtype=jnp.float32):
    """doubleConv forward.  x_nchw: (N, Cin, H, W).  params in PyTorch layout."""
    N, Cin, H, W = x_nchw.shape
    Cmid = params["w1"].shape[0]
    Cout = params["w2"].shape[0]
    assert params["w1"].shape == (Cmid, Cin, 3, 3)
    assert params["w2"].shape == (Cout, Cmid, 3, 3)
    NHW = N * H * W
    PAD = W + 1  # flat halo so every (ky,kx)-shifted slice stays in-bounds

    # Lane-dense layouts.  These transposes/reshapes touch only tiny tensors;
    # all activation-sized work happens inside the single fused kernel.
    x_flat = jnp.transpose(x_nchw, (1, 0, 2, 3)).reshape(Cin, NHW).astype(jnp.float32)
    # im2col weight layout: w_mat[co, (ky*3+kx)*Cin + ci] = w[co, ci, ky, kx]
    w1 = jnp.transpose(params["w1"], (0, 2, 3, 1)).reshape(Cmid, 9 * Cin).astype(compute_dtype)
    w2 = jnp.transpose(params["w2"], (0, 2, 3, 1)).reshape(Cout, 9 * Cmid).astype(compute_dtype)
    g1 = params["gamma1"].reshape(Cmid, 1).astype(jnp.float32)
    beta1 = params["beta1"].reshape(Cmid, 1).astype(jnp.float32)
    g2 = params["gamma2"].reshape(Cout, 1).astype(jnp.float32)
    beta2 = params["beta2"].reshape(Cout, 1).astype(jnp.float32)
    # NOTE: conv biases (params["b1"]/["b2"]) are exact no-ops in front of
    # training-mode BatchNorm (batch-mean subtraction cancels any per-channel
    # constant), so they are deliberately not fed to the kernel.

    # Per-position row/col indices inside each image (drive the halo masks).
    q = jnp.arange(NHW, dtype=jnp.int32)
    row = ((q // W) % H).reshape(1, NHW)
    col = (q % W).reshape(1, NHW)

    # VMEM budget guard: every operand + scratch of this no-grid kernel is
    # VMEM-resident.
    cbytes = jnp.dtype(compute_dtype).itemsize
    vmem_bytes = (
        4 * (Cin * NHW + 2 * NHW + Cmid + Cout + Cout * NHW
             + (Cin + Cmid) * (NHW + 2 * PAD))
        + cbytes * (9 * Cin * (Cmid + NHW) + 9 * Cmid * (Cout + NHW)))
    # TODO(synk): spatially tiled multi-core variant (grid over batch / H-row
    # blocks with a 2-row halo and two-pass BN partial stats) for feature maps
    # that do not fit in VMEM (budget against v7x: 64 MiB phys / 32 MiB scoped).
    assert vmem_bytes < 8 * 1024 * 1024, (
        f"fused doubleConv kernel needs ~{vmem_bytes} B of VMEM; this "
        "single-shot kernel only supports feature maps that fit in VMEM")

    kernel = functools.partial(_double_conv_kernel, H=H, W=W, eps=eps)
    out_flat = pl.pallas_call(
        kernel,
        # No grid: one invocation, every operand is a whole-array VMEM block.
        out_shape=jax.ShapeDtypeStruct((Cout, NHW), jnp.float32),
        scratch_shapes=[
            pltpu.VMEM((Cin, NHW + 2 * PAD), jnp.float32),   # padded x
            pltpu.VMEM((9 * Cin, NHW), compute_dtype),       # im2col for conv1
            pltpu.VMEM((Cmid, NHW + 2 * PAD), jnp.float32),  # padded z1
            pltpu.VMEM((9 * Cmid, NHW), compute_dtype),      # im2col for conv2
        ],
    )(x_flat, row, col, w1, g1, beta1, w2, g2, beta2)

    # (Cout, N*H*W) -> (N, Cout, H, W); tiny reshape/transpose handled by XLA.
    return jnp.transpose(out_flat.reshape(Cout, N, H, W), (1, 0, 2, 3))


# ---------------------------------------------------------------------------
# Parameter init (PyTorch layouts, BatchNorm default affine init)
# ---------------------------------------------------------------------------
def init_double_conv_params(key, input_channels, output_channels,
                            mild_channels=None):
    if not mild_channels:
        mild_channels = output_channels
    k1, k2, k3, k4 = jax.random.split(key, 4)
    return {
        "w1": jax.random.normal(k1, (mild_channels, input_channels, 3, 3),
                                jnp.float32) * 0.1,
        "b1": jax.random.normal(k3, (mild_channels,), jnp.float32) * 0.1,
        "gamma1": jnp.ones((mild_channels,), jnp.float32),
        "beta1": jnp.zeros((mild_channels,), jnp.float32),
        "w2": jax.random.normal(k2, (output_channels, mild_channels, 3, 3),
                                jnp.float32) * 0.1,
        "b2": jax.random.normal(k4, (output_channels,), jnp.float32) * 0.1,
        "gamma2": jnp.ones((output_channels,), jnp.float32),
        "beta2": jnp.zeros((output_channels,), jnp.float32),
    }


# ---------------------------------------------------------------------------
# Pure-JAX/XLA reference (conv WITH bias + training-mode BN + ReLU, twice)
# ---------------------------------------------------------------------------
def _reference_double_conv(x, params, eps=1e-5):
    def conv(x, w, b):
        y = jax.lax.conv_general_dilated(
            x, w, window_strides=(1, 1), padding=((1, 1), (1, 1)),
            dimension_numbers=("NCHW", "OIHW", "NCHW"),
            precision=jax.lax.Precision.HIGHEST)
        return y + b[None, :, None, None]

    def bn_relu(y, gamma, beta):
        mean = jnp.mean(y, axis=(0, 2, 3), keepdims=True)
        var = jnp.mean(jnp.square(y - mean), axis=(0, 2, 3), keepdims=True)
        yn = (y - mean) * jax.lax.rsqrt(var + eps)
        return jnp.maximum(yn * gamma[None, :, None, None]
                           + beta[None, :, None, None], 0.0)

    z1 = bn_relu(conv(x, params["w1"], params["b1"]),
                 params["gamma1"], params["beta1"])
    return bn_relu(conv(z1, params["w2"], params["b2"]),
                   params["gamma2"], params["beta2"])


if __name__ == "__main__":
    key = jax.random.PRNGKey(0)
    kx, kp = jax.random.split(key)

    N, Cin, H, W = 2, 4, 16, 16
    Cout = 8  # mild_channels defaults to output_channels

    x = jax.random.normal(kx, (N, Cin, H, W), jnp.float32)
    params = init_double_conv_params(kp, Cin, Cout)

    out = jax.jit(double_conv_forward)(x, params)
    out = jax.block_until_ready(out)
    assert out.shape == (N, Cout, H, W), out.shape

    # Correctness gate against a pure-XLA reference.  Tolerance is loose only
    # to accommodate different f32 MXU pass decompositions; structural errors
    # would be O(1).
    ref = jax.block_until_ready(jax.jit(_reference_double_conv)(x, params))
    max_err = float(jnp.max(jnp.abs(out - ref)))
    assert max_err < 3e-2, f"kernel vs reference mismatch: max abs err {max_err}"

    print("KERNEL_OK")
</pallas_src>

<mosaic_0001>
module attributes {stable_mosaic.version = 11 : i64} {
  func.func @_double_conv_kernel(%arg0: memref<4x512xf32, #tpu.memory_space<vmem>>, %arg1: memref<1x512xi32, #tpu.memory_space<vmem>>, %arg2: memref<1x512xi32, #tpu.memory_space<vmem>>, %arg3: memref<8x36xf32, #tpu.memory_space<vmem>>, %arg4: memref<8x1xf32, #tpu.memory_space<vmem>>, %arg5: memref<8x1xf32, #tpu.memory_space<vmem>>, %arg6: memref<8x72xf32, #tpu.memory_space<vmem>>, %arg7: memref<8x1xf32, #tpu.memory_space<vmem>>, %arg8: memref<8x1xf32, #tpu.memory_space<vmem>>, %arg9: memref<8x512xf32, #tpu.memory_space<vmem>>, %arg10: memref<4x546xf32, #tpu.memory_space<vmem>>, %arg11: memref<36x512xf32, #tpu.memory_space<vmem>>, %arg12: memref<8x546xf32, #tpu.memory_space<vmem>>, %arg13: memref<72x512xf32, #tpu.memory_space<vmem>>) attributes {dimension_semantics = [], scalar_prefetch = 0 : i64, scratch_operands = 4 : i64, tpu.core_type = #tpu.core_type<tc>} {
    %c0 = arith.constant 0 : index
    %c0_0 = arith.constant 0 : index
    %0 = vector.load %arg1[%c0, %c0_0] : memref<1x512xi32, #tpu.memory_space<vmem>>, vector<1x512xi32>
    %c0_1 = arith.constant 0 : index
    %c0_2 = arith.constant 0 : index
    %1 = vector.load %arg2[%c0_1, %c0_2] : memref<1x512xi32, #tpu.memory_space<vmem>>, vector<1x512xi32>
    %c0_3 = arith.constant 0 : index
    %c0_4 = arith.constant 0 : index
    %2 = vector.load %arg0[%c0_3, %c0_4] : memref<4x512xf32, #tpu.memory_space<vmem>>, vector<4x512xf32>
    %cst = arith.constant 0.000000e+00 : f32
    %3 = vector.broadcast %cst : f32 to vector<4x546xf32>
    %c0_5 = arith.constant 0 : index
    %c0_6 = arith.constant 0 : index
    %4 = vector.load %arg10[%c0_5, %c0_6] : memref<4x546xf32, #tpu.memory_space<vmem>>, vector<4x546xf32>
    tpu.vector_store %arg10[%c0_5, %c0_6], %3 {strides = array<i32>} : memref<4x546xf32, #tpu.memory_space<vmem>>, vector<4x546xf32>,
    %c0_7 = arith.constant 0 : index
    %c17 = arith.constant 17 : index
    %5 = vector.load %arg10[%c0_7, %c17] : memref<4x546xf32, #tpu.memory_space<vmem>>, vector<4x512xf32>
    tpu.vector_store %arg10[%c0_7, %c17], %2 {strides = array<i32>} : memref<4x546xf32, #tpu.memory_space<vmem>>, vector<4x512xf32>,
    %c0_8 = arith.constant 0 : index
    %c0_9 = arith.constant 0 : index
    %6 = vector.load %arg10[%c0_8, %c0_9] : memref<4x546xf32, #tpu.memory_space<vmem>>, vector<4x512xf32>
    %c-1_i32 = arith.constant -1 : i32
    %7 = vector.broadcast %c-1_i32 : i32 to vector<1x512xi32>
    %8 = arith.addi %0, %7 : vector<1x512xi32>
    %c0_i32 = arith.constant 0 : i32
    %9 = vector.broadcast %c0_i32 : i32 to vector<1x512xi32>
    %10 = arith.cmpi sge, %8, %9 : vector<1x512xi32>
    %c-1_i32_10 = arith.constant -1 : i32
    %11 = vector.broadcast %c-1_i32_10 : i32 to vector<1x512xi32>
    %12 = arith.addi %0, %11 : vector<1x512xi32>
    %c16_i32 = arith.constant 16 : i32
    %13 = vector.broadcast %c16_i32 : i32 to vector<1x512xi32>
    %14 = arith.cmpi slt, %12, %13 : vector<1x512xi32>
    %15 = arith.andi %10, %14 : vector<1x512xi1>
    %c-1_i32_11 = arith.constant -1 : i32
    %16 = vector.broadcast %c-1_i32_11 : i32 to vector<1x512xi32>
    %17 = arith.addi %1, %16 : vector<1x512xi32>
    %c0_i32_12 = arith.constant 0 : i32
    %18 = vector.broadcast %c0_i32_12 : i32 to vector<1x512xi32>
    %19 = arith.cmpi sge, %17, %18 : vector<1x512xi32>
    %20 = arith.andi %15, %19 : vector<1x512xi1>
    %c-1_i32_13 = arith.constant -1 : i32
    %21 = vector.broadcast %c-1_i32_13 : i32 to vector<1x512xi32>
    %22 = arith.addi %1, %21 : vector<1x512xi32>
    %c16_i32_14 = arith.constant 16 : i32
    %23 = vector.broadcast %c16_i32_14 : i32 to vector<1x512xi32>
    %24 = arith.cmpi slt, %22, %23 : vector<1x512xi32>
    %25 = arith.andi %20, %24 : vector<1x512xi1>
    %cst_15 = arith.constant 0.000000e+00 : f32
    %26 = vector.shape_cast %25 : vector<1x512xi1> to vector<1x512xi1>
    %27 = vector.broadcast %26 : vector<1x512xi1> to vector<4x512xi1>
    %28 = vector.broadcast %cst_15 : f32 to vector<4x512xf32>
    %29 = arith.select %27, %6, %28 : vector<4x512xi1>, vector<4x512xf32>
    %c0_16 = arith.constant 0 : index
    %c0_17 = arith.constant 0 : index
    %30 = vector.load %arg11[%c0_16, %c0_17] : memref<36x512xf32, #tpu.memory_space<vmem>>, vector<4x512xf32>
    tpu.vector_store %arg11[%c0_16, %c0_17], %29 {strides = array<i32>} : memref<36x512xf32, #tpu.memory_space<vmem>>, vector<4x512xf32>,
    %c0_18 = arith.constant 0 : index
    %c1 = arith.constant 1 : index
    %31 = vector.load %arg10[%c0_18, %c1] : memref<4x546xf32, #tpu.memory_space<vmem>>, vector<4x512xf32>
    %c-1_i32_19 = arith.constant -1 : i32
    %32 = vector.broadcast %c-1_i32_19 : i32 to vector<1x512xi32>
    %33 = arith.addi %0, %32 : vector<1x512xi32>
    %c0_i32_20 = arith.constant 0 : i32
    %34 = vector.broadcast %c0_i32_20 : i32 to vector<1x512xi32>
    %35 = arith.cmpi sge, %33, %34 : vector<1x512xi32>
    %c-1_i32_21 = arith.constant -1 : i32
    %36 = vector.broadcast %c-1_i32_21 : i32 to vector<1x512xi32>
    %37 = arith.addi %0, %36 : vector<1x512xi32>
    %c16_i32_22 = arith.constant 16 : i32
    %38 = vector.broadcast %c16_i32_22 : i32 to vector<1x512xi32>
    %39 = arith.cmpi slt, %37, %38 : vector<1x512xi32>
    %40 = arith.andi %35, %39 : vector<1x512xi1>
    %c0_i32_23 = arith.constant 0 : i32
    %41 = vector.broadcast %c0_i32_23 : i32 to vector<1x512xi32>
    %42 = arith.addi %1, %41 : vector<1x512xi32>
    %c0_i32_24 = arith.constant 0 : i32
    %43 = vector.broadcast %c0_i32_24 : i32 to vector<1x512xi32>
    %44 = arith.cmpi sge, %42, %43 : vector<1x512xi32>
    %45 = arith.andi %40, %44 : vector<1x512xi1>
    %c0_i32_25 = arith.constant 0 : i32
    %46 = vector.broadcast %c0_i32_25 : i32 to vector<1x512xi32>
    %47 = arith.addi %1, %46 : vector<1x512xi32>
    %c16_i32_26 = arith.constant 16 : i32
    %48 = vector.broadcast %c16_i32_26 : i32 to vector<1x512xi32>
    %49 = arith.cmpi slt, %47, %48 : vector<1x512xi32>
    %50 = arith.andi %45, %49 : vector<1x512xi1>
    %cst_27 = arith.constant 0.000000e+00 : f32
    %51 = vector.shape_cast %50 : vector<1x512xi1> to vector<1x512xi1>
    %52 = vector.broadcast %51 : vector<1x512xi1> to vector<4x512xi1>
    %53 = vector.broadcast %cst_27 : f32 to vector<4x512xf32>
    %54 = arith.select %52, %31, %53 : vector<4x512xi1>, vector<4x512xf32>
    %c4 = arith.constant 4 : index
    %c0_28 = arith.constant 0 : index
    %55 = vector.load %arg11[%c4, %c0_28] : memref<36x512xf32, #tpu.memory_space<vmem>>, vector<4x512xf32>
    tpu.vector_store %arg11[%c4, %c0_28], %54 {strides = array<i32>} : memref<36x512xf32, #tpu.memory_space<vmem>>, vector<4x512xf32>,
    %c0_29 = arith.constant 0 : index
    %c2 = arith.constant 2 : index
    %56 = vector.load %arg10[%c0_29, %c2] : memref<4x546xf32, #tpu.memory_space<vmem>>, vector<4x512xf32>
    %c-1_i32_30 = arith.constant -1 : i32
    %57 = vector.broadcast %c-1_i32_30 : i32 to vector<1x512xi32>
    %58 = arith.addi %0, %57 : vector<1x512xi32>
    %c0_i32_31 = arith.constant 0 : i32
    %59 = vector.broadcast %c0_i32_31 : i32 to vector<1x512xi32>
    %60 = arith.cmpi sge, %58, %59 : vector<1x512xi32>
    %c-1_i32_32 = arith.constant -1 : i32
    %61 = vector.broadcast %c-1_i32_32 : i32 to vector<1x512xi32>
    %62 = arith.addi %0, %61 : vector<1x512xi32>
    %c16_i32_33 = arith.constant 16 : i32
    %63 = vector.broadcast %c16_i32_33 : i32 to vector<1x512xi32>
    %64 = arith.cmpi slt, %62, %63 : vector<1x512xi32>
    %65 = arith.andi %60, %64 : vector<1x512xi1>
    %c1_i32 = arith.constant 1 : i32
    %66 = vector.broadcast %c1_i32 : i32 to vector<1x512xi32>
    %67 = arith.addi %1, %66 : vector<1x512xi32>
    %c0_i32_34 = arith.constant 0 : i32
    %68 = vector.broadcast %c0_i32_34 : i32 to vector<1x512xi32>
    %69 = arith.cmpi sge, %67, %68 : vector<1x512xi32>
    %70 = arith.andi %65, %69 : vector<1x512xi1>
    %c1_i32_35 = arith.constant 1 : i32
    %71 = vector.broadcast %c1_i32_35 : i32 to vector<1x512xi32>
    %72 = arith.addi %1, %71 : vector<1x512xi32>
    %c16_i32_36 = arith.constant 16 : i32
    %73 = vector.broadcast %c16_i32_36 : i32 to vector<1x512xi32>
    %74 = arith.cmpi slt, %72, %73 : vector<1x512xi32>
    %75 = arith.andi %70, %74 : vector<1x512xi1>
    %cst_37 = arith.constant 0.000000e+00 : f32
    %76 = vector.shape_cast %75 : vector<1x512xi1> to vector<1x512xi1>
    %77 = vector.broadcast %76 : vector<1x512xi1> to vector<4x512xi1>
    %78 = vector.broadcast %cst_37 : f32 to vector<4x512xf32>
    %79 = arith.select %77, %56, %78 : vector<4x512xi1>, vector<4x512xf32>
    %c8 = arith.constant 8 : index
    %c0_38 = arith.constant 0 : index
    %80 = vector.load %arg11[%c8, %c0_38] : memref<36x512xf32, #tpu.memory_space<vmem>>, vector<4x512xf32>
    tpu.vector_store %arg11[%c8, %c0_38], %79 {strides = array<i32>} : memref<36x512xf32, #tpu.memory_space<vmem>>, vector<4x512xf32>,
    %c0_39 = arith.constant 0 : index
    %c16 = arith.constant 16 : index
    %81 = vector.load %arg10[%c0_39, %c16] : memref<4x546xf32, #tpu.memory_space<vmem>>, vector<4x512xf32>
    %c0_i32_40 = arith.constant 0 : i32
    %82 = vector.broadcast %c0_i32_40 : i32 to vector<1x512xi32>
    %83 = arith.addi %0, %82 : vector<1x512xi32>
    %c0_i32_41 = arith.constant 0 : i32
    %84 = vector.broadcast %c0_i32_41 : i32 to vector<1x512xi32>
    %85 = arith.cmpi sge, %83, %84 : vector<1x512xi32>
    %c0_i32_42 = arith.constant 0 : i32
    %86 = vector.broadcast %c0_i32_42 : i32 to vector<1x512xi32>
    %87 = arith.addi %0, %86 : vector<1x512xi32>
    %c16_i32_43 = arith.constant 16 : i32
    %88 = vector.broadcast %c16_i32_43 : i32 to vector<1x512xi32>
    %89 = arith.cmpi slt, %87, %88 : vector<1x512xi32>
    %90 = arith.andi %85, %89 : vector<1x512xi1>
    %c-1_i32_44 = arith.constant -1 : i32
    %91 = vector.broadcast %c-1_i32_44 : i32 to vector<1x512xi32>
    %92 = arith.addi %1, %91 : vector<1x512xi32>
    %c0_i32_45 = arith.constant 0 : i32
    %93 = vector.broadcast %c0_i32_45 : i32 to vector<1x512xi32>
    %94 = arith.cmpi sge, %92, %93 : vector<1x512xi32>
    %95 = arith.andi %90, %94 : vector<1x512xi1>
    %c-1_i32_46 = arith.constant -1 : i32
    %96 = vector.broadcast %c-1_i32_46 : i32 to vector<1x512xi32>
    %97 = arith.addi %1, %96 : vector<1x512xi32>
    %c16_i32_47 = arith.constant 16 : i32
    %98 = vector.broadcast %c16_i32_47 : i32 to vector<1x512xi32>
    %99 = arith.cmpi slt, %97, %98 : vector<1x512xi32>
    %100 = arith.andi %95, %99 : vector<1x512xi1>
    %cst_48 = arith.constant 0.000000e+00 : f32
    %101 = vector.shape_cast %100 : vector<1x512xi1> to vector<1x512xi1>
    %102 = vector.broadcast %101 : vector<1x512xi1> to vector<4x512xi1>
    %103 = vector.broadcast %cst_48 : f32 to vector<4x512xf32>
    %104 = arith.select %102, %81, %103 : vector<4x512xi1>, vector<4x512xf32>
    %c12 = arith.constant 12 : index
    %c0_49 = arith.constant 0 : index
    %105 = vector.load %arg11[%c12, %c0_49] : memref<36x512xf32, #tpu.memory_space<vmem>>, vector<4x512xf32>
    tpu.vector_store %arg11[%c12, %c0_49], %104 {strides = array<i32>} : memref<36x512xf32, #tpu.memory_space<vmem>>, vector<4x512xf32>,
    %c0_50 = arith.constant 0 : index
    %c17_51 = arith.constant 17 : index
    %106 = vector.load %arg10[%c0_50, %c17_51] : memref<4x546xf32, #tpu.memory_space<vmem>>, vector<4x512xf32>
    %c0_i32_52 = arith.constant 0 : i32
    %107 = vector.broadcast %c0_i32_52 : i32 to vector<1x512xi32>
    %108 = arith.addi %0, %107 : vector<1x512xi32>
    %c0_i32_53 = arith.constant 0 : i32
    %109 = vector.broadcast %c0_i32_53 : i32 to vector<1x512xi32>
    %110 = arith.cmpi sge, %108, %109 : vector<1x512xi32>
    %c0_i32_54 = arith.constant 0 : i32
    %111 = vector.broadcast %c0_i32_54 : i32 to vector<1x512xi32>
    %112 = arith.addi %0, %111 : vector<1x512xi32>
    %c16_i32_55 = arith.constant 16 : i32
    %113 = vector.broadcast %c16_i32_55 : i32 to vector<1x512xi32>
    %114 = arith.cmpi slt, %112, %113 : vector<1x512xi32>
    %115 = arith.andi %110, %114 : vector<1x512xi1>
    %c0_i32_56 = arith.constant 0 : i32
    %116 = vector.broadcast %c0_i32_56 : i32 to vector<1x512xi32>
    %117 = arith.addi %1, %116 : vector<1x512xi32>
    %c0_i32_57 = arith.constant 0 : i32
    %118 = vector.broadcast %c0_i32_57 : i32 to vector<1x512xi32>
    %119 = arith.cmpi sge, %117, %118 : vector<1x512xi32>
    %120 = arith.andi %115, %119 : vector<1x512xi1>
    %c0_i32_58 = arith.constant 0 : i32
    %121 = vector.broadcast %c0_i32_58 : i32 to vector<1x512xi32>
    %122 = arith.addi %1, %121 : vector<1x512xi32>
    %c16_i32_59 = arith.constant 16 : i32
    %123 = vector.broadcast %c16_i32_59 : i32 to vector<1x512xi32>
    %124 = arith.cmpi slt, %122, %123 : vector<1x512xi32>
    %125 = arith.andi %120, %124 : vector<1x512xi1>
    %cst_60 = arith.constant 0.000000e+00 : f32
    %126 = vector.shape_cast %125 : vector<1x512xi1> to vector<1x512xi1>
    %127 = vector.broadcast %126 : vector<1x512xi1> to vector<4x512xi1>
    %128 = vector.broadcast %cst_60 : f32 to vector<4x512xf32>
    %129 = arith.select %127, %106, %128 : vector<4x512xi1>, vector<4x512xf32>
    %c16_61 = arith.constant 16 : index
    %c0_62 = arith.constant 0 : index
    %130 = vector.load %arg11[%c16_61, %c0_62] : memref<36x512xf32, #tpu.memory_space<vmem>>, vector<4x512xf32>
    tpu.vector_store %arg11[%c16_61, %c0_62], %129 {strides = array<i32>} : memref<36x512xf32, #tpu.memory_space<vmem>>, vector<4x512xf32>,
    %c0_63 = arith.constant 0 : index
    %c18 = arith.constant 18 : index
    %131 = vector.load %arg10[%c0_63, %c18] : memref<4x546xf32, #tpu.memory_space<vmem>>, vector<4x512xf32>
    %c0_i32_64 = arith.constant 0 : i32
    %132 = vector.broadcast %c0_i32_64 : i32 to vector<1x512xi32>
    %133 = arith.addi %0, %132 : vector<1x512xi32>
    %c0_i32_65 = arith.constant 0 : i32
    %134 = vector.broadcast %c0_i32_65 : i32 to vector<1x512xi32>
    %135 = arith.cmpi sge, %133, %134 : vector<1x512xi32>
    %c0_i32_66 = arith.constant 0 : i32
    %136 = vector.broadcast %c0_i32_66 : i32 to vector<1x512xi32>
    %137 = arith.addi %0, %136 : vector<1x512xi32>
    %c16_i32_67 = arith.constant 16 : i32
    %138 = vector.broadcast %c16_i32_67 : i32 to vector<1x512xi32>
    %139 = arith.cmpi slt, %137, %138 : vector<1x512xi32>
    %140 = arith.andi %135, %139 : vector<1x512xi1>
    %c1_i32_68 = arith.constant 1 : i32
    %141 = vector.broadcast %c1_i32_68 : i32 to vector<1x512xi32>
    %142 = arith.addi %1, %141 : vector<1x512xi32>
    %c0_i32_69 = arith.constant 0 : i32
    %143 = vector.broadcast %c0_i32_69 : i32 to vector<1x512xi32>
    %144 = arith.cmpi sge, %142, %143 : vector<1x512xi32>
    %145 = arith.andi %140, %144 : vector<1x512xi1>
    %c1_i32_70 = arith.constant 1 : i32
    %146 = vector.broadcast %c1_i32_70 : i32 to vector<1x512xi32>
    %147 = arith.addi %1, %146 : vector<1x512xi32>
    %c16_i32_71 = arith.constant 16 : i32
    %148 = vector.broadcast %c16_i32_71 : i32 to vector<1x512xi32>
    %149 = arith.cmpi slt, %147, %148 : vector<1x512xi32>
    %150 = arith.andi %145, %149 : vector<1x512xi1>
    %cst_72 = arith.constant 0.000000e+00 : f32
    %151 = vector.shape_cast %150 : vector<1x512xi1> to vector<1x512xi1>
    %152 = vector.broadcast %151 : vector<1x512xi1> to vector<4x512xi1>
    %153 = vector.broadcast %cst_72 : f32 to vector<4x512xf32>
    %154 = arith.select %152, %131, %153 : vector<4x512xi1>, vector<4x512xf32>
    %c20 = arith.constant 20 : index
    %c0_73 = arith.constant 0 : index
    %155 = vector.load %arg11[%c20, %c0_73] : memref<36x512xf32, #tpu.memory_space<vmem>>, vector<4x512xf32>
    tpu.vector_store %arg11[%c20, %c0_73], %154 {strides = array<i32>} : memref<36x512xf32, #tpu.memory_space<vmem>>, vector<4x512xf32>,
    %c0_74 = arith.constant 0 : index
    %c32 = arith.constant 32 : index
    %156 = vector.load %arg10[%c0_74, %c32] : memref<4x546xf32, #tpu.memory_space<vmem>>, vector<4x512xf32>
    %c1_i32_75 = arith.constant 1 : i32
    %157 = vector.broadcast %c1_i32_75 : i32 to vector<1x512xi32>
    %158 = arith.addi %0, %157 : vector<1x512xi32>
    %c0_i32_76 = arith.constant 0 : i32
    %159 = vector.broadcast %c0_i32_76 : i32 to vector<1x512xi32>
    %160 = arith.cmpi sge, %158, %159 : vector<1x512xi32>
    %c1_i32_77 = arith.constant 1 : i32
    %161 = vector.broadcast %c1_i32_77 : i32 to vector<1x512xi32>
    %162 = arith.addi %0, %161 : vector<1x512xi32>
    %c16_i32_78 = arith.constant 16 : i32
    %163 = vector.broadcast %c16_i32_78 : i32 to vector<1x512xi32>
    %164 = arith.cmpi slt, %162, %163 : vector<1x512xi32>
    %165 = arith.andi %160, %164 : vector<1x512xi1>
    %c-1_i32_79 = arith.constant -1 : i32
    %166 = vector.broadcast %c-1_i32_79 : i32 to vector<1x512xi32>
    %167 = arith.addi %1, %166 : vector<1x512xi32>
    %c0_i32_80 = arith.constant 0 : i32
    %168 = vector.broadcast %c0_i32_80 : i32 to vector<1x512xi32>
    %169 = arith.cmpi sge, %167, %168 : vector<1x512xi32>
    %170 = arith.andi %165, %169 : vector<1x512xi1>
    %c-1_i32_81 = arith.constant -1 : i32
    %171 = vector.broadcast %c-1_i32_81 : i32 to vector<1x512xi32>
    %172 = arith.addi %1, %171 : vector<1x512xi32>
    %c16_i32_82 = arith.constant 16 : i32
    %173 = vector.broadcast %c16_i32_82 : i32 to vector<1x512xi32>
    %174 = arith.cmpi slt, %172, %173 : vector<1x512xi32>
    %175 = arith.andi %170, %174 : vector<1x512xi1>
    %cst_83 = arith.constant 0.000000e+00 : f32
    %176 = vector.shape_cast %175 : vector<1x512xi1> to vector<1x512xi1>
    %177 = vector.broadcast %176 : vector<1x512xi1> to vector<4x512xi1>
    %178 = vector.broadcast %cst_83 : f32 to vector<4x512xf32>
    %179 = arith.select %177, %156, %178 : vector<4x512xi1>, vector<4x512xf32>
    %c24 = arith.constant 24 : index
    %c0_84 = arith.constant 0 : index
    %180 = vector.load %arg11[%c24, %c0_84] : memref<36x512xf32, #tpu.memory_space<vmem>>, vector<4x512xf32>
    tpu.vector_store %arg11[%c24, %c0_84], %179 {strides = array<i32>} : memref<36x512xf32, #tpu.memory_space<vmem>>, vector<4x512xf32>,
    %c0_85 = arith.constant 0 : index
    %c33 = arith.constant 33 : index
    %181 = vector.load %arg10[%c0_85, %c33] : memref<4x546xf32, #tpu.memory_space<vmem>>, vector<4x512xf32>
    %c1_i32_86 = arith.constant 1 : i32
    %182 = vector.broadcast %c1_i32_86 : i32 to vector<1x512xi32>
    %183 = arith.addi %0, %182 : vector<1x512xi32>
    %c0_i32_87 = arith.constant 0 : i32
    %184 = vector.broadcast %c0_i32_87 : i32 to vector<1x512xi32>
    %185 = arith.cmpi sge, %183, %184 : vector<1x512xi32>
    %c1_i32_88 = arith.constant 1 : i32
    %186 = vector.broadcast %c1_i32_88 : i32 to vector<1x512xi32>
    %187 = arith.addi %0, %186 : vector<1x512xi32>
    %c16_i32_89 = arith.constant 16 : i32
    %188 = vector.broadcast %c16_i32_89 : i32 to vector<1x512xi32>
    %189 = arith.cmpi slt, %187, %188 : vector<1x512xi32>
    %190 = arith.andi %185, %189 : vector<1x512xi1>
    %c0_i32_90 = arith.constant 0 : i32
    %191 = vector.broadcast %c0_i32_90 : i32 to vector<1x512xi32>
    %192 = arith.addi %1, %191 : vector<1x512xi32>
    %c0_i32_91 = arith.constant 0 : i32
    %193 = vector.broadcast %c0_i32_91 : i32 to vector<1x512xi32>
    %194 = arith.cmpi sge, %192, %193 : vector<1x512xi32>
    %195 = arith.andi %190, %194 : vector<1x512xi1>
    %c0_i32_92 = arith.constant 0 : i32
    %196 = vector.broadcast %c0_i32_92 : i32 to vector<1x512xi32>
    %197 = arith.addi %1, %196 : vector<1x512xi32>
    %c16_i32_93 = arith.constant 16 : i32
    %198 = vector.broadcast %c16_i32_93 : i32 to vector<1x512xi32>
    %199 = arith.cmpi slt, %197, %198 : vector<1x512xi32>
    %200 = arith.andi %195, %199 : vector<1x512xi1>
    %cst_94 = arith.constant 0.000000e+00 : f32
    %201 = vector.shape_cast %200 : vector<1x512xi1> to vector<1x512xi1>
    %202 = vector.broadcast %201 : vector<1x512xi1> to vector<4x512xi1>
    %203 = vector.broadcast %cst_94 : f32 to vector<4x512xf32>
    %204 = arith.select %202, %181, %203 : vector<4x512xi1>, vector<4x512xf32>
    %c28 = arith.constant 28 : index
    %c0_95 = arith.constant 0 : index
    %205 = vector.load %arg11[%c28, %c0_95] : memref<36x512xf32, #tpu.memory_space<vmem>>, vector<4x512xf32>
    tpu.vector_store %arg11[%c28, %c0_95], %204 {strides = array<i32>} : memref<36x512xf32, #tpu.memory_space<vmem>>, vector<4x512xf32>,
    %c0_96 = arith.constant 0 : index
    %c34 = arith.constant 34 : index
    %206 = vector.load %arg10[%c0_96, %c34] : memref<4x546xf32, #tpu.memory_space<vmem>>, vector<4x512xf32>
    %c1_i32_97 = arith.constant 1 : i32
    %207 = vector.broadcast %c1_i32_97 : i32 to vector<1x512xi32>
    %208 = arith.addi %0, %207 : vector<1x512xi32>
    %c0_i32_98 = arith.constant 0 : i32
    %209 = vector.broadcast %c0_i32_98 : i32 to vector<1x512xi32>
    %210 = arith.cmpi sge, %208, %209 : vector<1x512xi32>
    %c1_i32_99 = arith.constant 1 : i32
    %211 = vector.broadcast %c1_i32_99 : i32 to vector<1x512xi32>
    %212 = arith.addi %0, %211 : vector<1x512xi32>
    %c16_i32_100 = arith.constant 16 : i32
    %213 = vector.broadcast %c16_i32_100 : i32 to vector<1x512xi32>
    %214 = arith.cmpi slt, %212, %213 : vector<1x512xi32>
    %215 = arith.andi %210, %214 : vector<1x512xi1>
    %c1_i32_101 = arith.constant 1 : i32
    %216 = vector.broadcast %c1_i32_101 : i32 to vector<1x512xi32>
    %217 = arith.addi %1, %216 : vector<1x512xi32>
    %c0_i32_102 = arith.constant 0 : i32
    %218 = vector.broadcast %c0_i32_102 : i32 to vector<1x512xi32>
    %219 = arith.cmpi sge, %217, %218 : vector<1x512xi32>
    %220 = arith.andi %215, %219 : vector<1x512xi1>
    %c1_i32_103 = arith.constant 1 : i32
    %221 = vector.broadcast %c1_i32_103 : i32 to vector<1x512xi32>
    %222 = arith.addi %1, %221 : vector<1x512xi32>
    %c16_i32_104 = arith.constant 16 : i32
    %223 = vector.broadcast %c16_i32_104 : i32 to vector<1x512xi32>
    %224 = arith.cmpi slt, %222, %223 : vector<1x512xi32>
    %225 = arith.andi %220, %224 : vector<1x512xi1>
    %cst_105 = arith.constant 0.000000e+00 : f32
    %226 = vector.shape_cast %225 : vector<1x512xi1> to vector<1x512xi1>
    %227 = vector.broadcast %226 : vector<1x512xi1> to vector<4x512xi1>
    %228 = vector.broadcast %cst_105 : f32 to vector<4x512xf32>
    %229 = arith.select %227, %206, %228 : vector<4x512xi1>, vector<4x512xf32>
    %c32_106 = arith.constant 32 : index
    %c0_107 = arith.constant 0 : index
    %230 = vector.load %arg11[%c32_106, %c0_107] : memref<36x512xf32, #tpu.memory_space<vmem>>, vector<4x512xf32>
    tpu.vector_store %arg11[%c32_106, %c0_107], %229 {strides = array<i32>} : memref<36x512xf32, #tpu.memory_space<vmem>>, vector<4x512xf32>,
    %c0_108 = arith.constant 0 : index
    %c0_109 = arith.constant 0 : index
    %231 = vector.load %arg3[%c0_108, %c0_109] : memref<8x36xf32, #tpu.memory_space<vmem>>, vector<8x36xf32>
    %c0_110 = arith.constant 0 : index
    %c0_111 = arith.constant 0 : index
    %232 = vector.load %arg11[%c0_110, %c0_111] : memref<36x512xf32, #tpu.memory_space<vmem>>, vector<36x512xf32>
    %cst_112 = arith.constant dense<0.000000e+00> : vector<8x512xf32>
    %233 = tpu.matmul %231, %232, %cst_112 {dimension_numbers = #tpu.dot_dimension_numbers<[1], [0], [0], [1], [0, 0, 1, 1], [], []>} : vector<8x36xf32>, vector<36x512xf32>, vector<8x512xf32> -> vector<8x512xf32>
    %cst_113 = arith.constant dense<0.000000e+00> : vector<8xf32>
    %234 = vector.multi_reduction <add>, %233, %cst_113 [1] : vector<8x512xf32> to vector<8xf32>
    %235 = vector.shape_cast %234 : vector<8xf32> to vector<8x1xf32>
    %cst_114 = arith.constant 5.120000e+02 : f32
    %236 = vector.broadcast %cst_114 : f32 to vector<8x1xf32>
    %237 = arith.divf %235, %236 : vector<8x1xf32>
    %238 = vector.broadcast %237 : vector<8x1xf32> to vector<8x512xf32>
    %239 = arith.subf %233, %238 : vector<8x512xf32>
    %240 = arith.mulf %239, %239 : vector<8x512xf32>
    %cst_115 = arith.constant dense<0.000000e+00> : vector<8xf32>
    %241 = vector.multi_reduction <add>, %240, %cst_115 [1] : vector<8x512xf32> to vector<8xf32>
    %242 = vector.shape_cast %241 : vector<8xf32> to vector<8x1xf32>
    %cst_116 = arith.constant 5.120000e+02 : f32
    %243 = vector.broadcast %cst_116 : f32 to vector<8x1xf32>
    %244 = arith.divf %242, %243 : vector<8x1xf32>
    %c0_117 = arith.constant 0 : index
    %c0_118 = arith.constant 0 : index
    %245 = vector.load %arg4[%c0_117, %c0_118] : memref<8x1xf32, #tpu.memory_space<vmem>>, vector<8x1xf32>
    %cst_119 = arith.constant 9.99999974E-6 : f32
    %246 = vector.broadcast %cst_119 : f32 to vector<8x1xf32>
    %247 = arith.addf %244, %246 : vector<8x1xf32>
    %248 = math.rsqrt %247 : vector<8x1xf32>
    %249 = arith.mulf %245, %248 : vector<8x1xf32>
    %c0_120 = arith.constant 0 : index
    %c0_121 = arith.constant 0 : index
    %250 = vector.load %arg5[%c0_120, %c0_121] : memref<8x1xf32, #tpu.memory_space<vmem>>, vector<8x1xf32>
    %251 = arith.mulf %237, %249 : vector<8x1xf32>
    %252 = arith.subf %250, %251 : vector<8x1xf32>
    %253 = vector.broadcast %249 : vector<8x1xf32> to vector<8x512xf32>
    %254 = arith.mulf %233, %253 : vector<8x512xf32>
    %255 = vector.broadcast %252 : vector<8x1xf32> to vector<8x512xf32>
    %256 = arith.addf %254, %255 : vector<8x512xf32>
    %cst_122 = arith.constant 0.000000e+00 : f32
    %257 = vector.broadcast %cst_122 : f32 to vector<8x512xf32>
    %258 = arith.maximumf %256, %257 : vector<8x512xf32>
    %cst_123 = arith.constant 0.000000e+00 : f32
    %259 = vector.broadcast %cst_123 : f32 to vector<8x546xf32>
    %c0_124 = arith.constant 0 : index
    %c0_125 = arith.constant 0 : index
    %260 = vector.load %arg12[%c0_124, %c0_125] : memref<8x546xf32, #tpu.memory_space<vmem>>, vector<8x546xf32>
    tpu.vector_store %arg12[%c0_124, %c0_125], %259 {strides = array<i32>} : memref<8x546xf32, #tpu.memory_space<vmem>>, vector<8x546xf32>,
    %c0_126 = arith.constant 0 : index
    %c17_127 = arith.constant 17 : index
    %261 = vector.load %arg12[%c0_126, %c17_127] : memref<8x546xf32, #tpu.memory_space<vmem>>, vector<8x512xf32>
    tpu.vector_store %arg12[%c0_126, %c17_127], %258 {strides = array<i32>} : memref<8x546xf32, #tpu.memory_space<vmem>>, vector<8x512xf32>,
    %c0_128 = arith.constant 0 : index
    %c0_129 = arith.constant 0 : index
    %262 = vector.load %arg12[%c0_128, %c0_129] : memref<8x546xf32, #tpu.memory_space<vmem>>, vector<8x512xf32>
    %c-1_i32_130 = arith.constant -1 : i32
    %263 = vector.broadcast %c-1_i32_130 : i32 to vector<1x512xi32>
    %264 = arith.addi %0, %263 : vector<1x512xi32>
    %c0_i32_131 = arith.constant 0 : i32
    %265 = vector.broadcast %c0_i32_131 : i32 to vector<1x512xi32>
    %266 = arith.cmpi sge, %264, %265 : vector<1x512xi32>
    %c-1_i32_132 = arith.constant -1 : i32
    %267 = vector.broadcast %c-1_i32_132 : i32 to vector<1x512xi32>
    %268 = arith.addi %0, %267 : vector<1x512xi32>
    %c16_i32_133 = arith.constant 16 : i32
    %269 = vector.broadcast %c16_i32_133 : i32 to vector<1x512xi32>
    %270 = arith.cmpi slt, %268, %269 : vector<1x512xi32>
    %271 = arith.andi %266, %270 : vector<1x512xi1>
    %c-1_i32_134 = arith.constant -1 : i32
    %272 = vector.broadcast %c-1_i32_134 : i32 to vector<1x512xi32>
    %273 = arith.addi %1, %272 : vector<1x512xi32>
    %c0_i32_135 = arith.constant 0 : i32
    %274 = vector.broadcast %c0_i32_135 : i32 to vector<1x512xi32>
    %275 = arith.cmpi sge, %273, %274 : vector<1x512xi32>
    %276 = arith.andi %271, %275 : vector<1x512xi1>
    %c-1_i32_136 = arith.constant -1 : i32
    %277 = vector.broadcast %c-1_i32_136 : i32 to vector<1x512xi32>
    %278 = arith.addi %1, %277 : vector<1x512xi32>
    %c16_i32_137 = arith.constant 16 : i32
    %279 = vector.broadcast %c16_i32_137 : i32 to vector<1x512xi32>
    %280 = arith.cmpi slt, %278, %279 : vector<1x512xi32>
    %281 = arith.andi %276, %280 : vector<1x512xi1>
    %cst_138 = arith.constant 0.000000e+00 : f32
    %282 = vector.shape_cast %281 : vector<1x512xi1> to vector<1x512xi1>
    %283 = vector.broadcast %282 : vector<1x512xi1> to vector<8x512xi1>
    %284 = vector.broadcast %cst_138 : f32 to vector<8x512xf32>
    %285 = arith.select %283, %262, %284 : vector<8x512xi1>, vector<8x512xf32>
    %c0_139 = arith.constant 0 : index
    %c0_140 = arith.constant 0 : index
    %286 = vector.load %arg13[%c0_139, %c0_140] : memref<72x512xf32, #tpu.memory_space<vmem>>, vector<8x512xf32>
    tpu.vector_store %arg13[%c0_139, %c0_140], %285 {strides = array<i32>} : memref<72x512xf32, #tpu.memory_space<vmem>>, vector<8x512xf32>,
    %c0_141 = arith.constant 0 : index
    %c1_142 = arith.constant 1 : index
    %287 = vector.load %arg12[%c0_141, %c1_142] : memref<8x546xf32, #tpu.memory_space<vmem>>, vector<8x512xf32>
    %c-1_i32_143 = arith.constant -1 : i32
    %288 = vector.broadcast %c-1_i32_143 : i32 to vector<1x512xi32>
    %289 = arith.addi %0, %288 : vector<1x512xi32>
    %c0_i32_144 = arith.constant 0 : i32
    %290 = vector.broadcast %c0_i32_144 : i32 to vector<1x512xi32>
    %291 = arith.cmpi sge, %289, %290 : vector<1x512xi32>
    %c-1_i32_145 = arith.constant -1 : i32
    %292 = vector.broadcast %c-1_i32_145 : i32 to vector<1x512xi32>
    %293 = arith.addi %0, %292 : vector<1x512xi32>
    %c16_i32_146 = arith.constant 16 : i32
    %294 = vector.broadcast %c16_i32_146 : i32 to vector<1x512xi32>
    %295 = arith.cmpi slt, %293, %294 : vector<1x512xi32>
    %296 = arith.andi %291, %295 : vector<1x512xi1>
    %c0_i32_147 = arith.constant 0 : i32
    %297 = vector.broadcast %c0_i32_147 : i32 to vector<1x512xi32>
    %298 = arith.addi %1, %297 : vector<1x512xi32>
    %c0_i32_148 = arith.constant 0 : i32
    %299 = vector.broadcast %c0_i32_148 : i32 to vector<1x512xi32>
    %300 = arith.cmpi sge, %298, %299 : vector<1x512xi32>
    %301 = arith.andi %296, %300 : vector<1x512xi1>
    %c0_i32_149 = arith.constant 0 : i32
    %302 = vector.broadcast %c0_i32_149 : i32 to vector<1x512xi32>
    %303 = arith.addi %1, %302 : vector<1x512xi32>
    %c16_i32_150 = arith.constant 16 : i32
    %304 = vector.broadcast %c16_i32_150 : i32 to vector<1x512xi32>
    %305 = arith.cmpi slt, %303, %304 : vector<1x512xi32>
    %306 = arith.andi %301, %305 : vector<1x512xi1>
    %cst_151 = arith.constant 0.000000e+00 : f32
    %307 = vector.shape_cast %306 : vector<1x512xi1> to vector<1x512xi1>
    %308 = vector.broadcast %307 : vector<1x512xi1> to vector<8x512xi1>
    %309 = vector.broadcast %cst_151 : f32 to vector<8x512xf32>
    %310 = arith.select %308, %287, %309 : vector<8x512xi1>, vector<8x512xf32>
    %c8_152 = arith.constant 8 : index
    %c0_153 = arith.constant 0 : index
    %311 = vector.load %arg13[%c8_152, %c0_153] : memref<72x512xf32, #tpu.memory_space<vmem>>, vector<8x512xf32>
    tpu.vector_store %arg13[%c8_152, %c0_153], %310 {strides = array<i32>} : memref<72x512xf32, #tpu.memory_space<vmem>>, vector<8x512xf32>,
    %c0_154 = arith.constant 0 : index
    %c2_155 = arith.constant 2 : index
    %312 = vector.load %arg12[%c0_154, %c2_155] : memref<8x546xf32, #tpu.memory_space<vmem>>, vector<8x512xf32>
    %c-1_i32_156 = arith.constant -1 : i32
    %313 = vector.broadcast %c-1_i32_156 : i32 to vector<1x512xi32>
    %314 = arith.addi %0, %313 : vector<1x512xi32>
    %c0_i32_157 = arith.constant 0 : i32
    %315 = vector.broadcast %c0_i32_157 : i32 to vector<1x512xi32>
    %316 = arith.cmpi sge, %314, %315 : vector<1x512xi32>
    %c-1_i32_158 = arith.constant -1 : i32
    %317 = vector.broadcast %c-1_i32_158 : i32 to vector<1x512xi32>
    %318 = arith.addi %0, %317 : vector<1x512xi32>
    %c16_i32_159 = arith.constant 16 : i32
    %319 = vector.broadcast %c16_i32_159 : i32 to vector<1x512xi32>
    %320 = arith.cmpi slt, %318, %319 : vector<1x512xi32>
    %321 = arith.andi %316, %320 : vector<1x512xi1>
    %c1_i32_160 = arith.constant 1 : i32
    %322 = vector.broadcast %c1_i32_160 : i32 to vector<1x512xi32>
    %323 = arith.addi %1, %322 : vector<1x512xi32>
    %c0_i32_161 = arith.constant 0 : i32
    %324 = vector.broadcast %c0_i32_161 : i32 to vector<1x512xi32>
    %325 = arith.cmpi sge, %323, %324 : vector<1x512xi32>
    %326 = arith.andi %321, %325 : vector<1x512xi1>
    %c1_i32_162 = arith.constant 1 : i32
    %327 = vector.broadcast %c1_i32_162 : i32 to vector<1x512xi32>
    %328 = arith.addi %1, %327 : vector<1x512xi32>
    %c16_i32_163 = arith.constant 16 : i32
    %329 = vector.broadcast %c16_i32_163 : i32 to vector<1x512xi32>
    %330 = arith.cmpi slt, %328, %329 : vector<1x512xi32>
    %331 = arith.andi %326, %330 : vector<1x512xi1>
    %cst_164 = arith.constant 0.000000e+00 : f32
    %332 = vector.shape_cast %331 : vector<1x512xi1> to vector<1x512xi1>
    %333 = vector.broadcast %332 : vector<1x512xi1> to vector<8x512xi1>
    %334 = vector.broadcast %cst_164 : f32 to vector<8x512xf32>
    %335 = arith.select %333, %312, %334 : vector<8x512xi1>, vector<8x512xf32>
    %c16_165 = arith.constant 16 : index
    %c0_166 = arith.constant 0 : index
    %336 = vector.load %arg13[%c16_165, %c0_166] : memref<72x512xf32, #tpu.memory_space<vmem>>, vector<8x512xf32>
    tpu.vector_store %arg13[%c16_165, %c0_166], %335 {strides = array<i32>} : memref<72x512xf32, #tpu.memory_space<vmem>>, vector<8x512xf32>,
    %c0_167 = arith.constant 0 : index
    %c16_168 = arith.constant 16 : index
    %337 = vector.load %arg12[%c0_167, %c16_168] : memref<8x546xf32, #tpu.memory_space<vmem>>, vector<8x512xf32>
    %c0_i32_169 = arith.constant 0 : i32
    %338 = vector.broadcast %c0_i32_169 : i32 to vector<1x512xi32>
    %339 = arith.addi %0, %338 : vector<1x512xi32>
    %c0_i32_170 = arith.constant 0 : i32
    %340 = vector.broadcast %c0_i32_170 : i32 to vector<1x512xi32>
    %341 = arith.cmpi sge, %339, %340 : vector<1x512xi32>
    %c0_i32_171 = arith.constant 0 : i32
    %342 = vector.broadcast %c0_i32_171 : i32 to vector<1x512xi32>
    %343 = arith.addi %0, %342 : vector<1x512xi32>
    %c16_i32_172 = arith.constant 16 : i32
    %344 = vector.broadcast %c16_i32_172 : i32 to vector<1x512xi32>
    %345 = arith.cmpi slt, %343, %344 : vector<1x512xi32>
    %346 = arith.andi %341, %345 : vector<1x512xi1>
    %c-1_i32_173 = arith.constant -1 : i32
    %347 = vector.broadcast %c-1_i32_173 : i32 to vector<1x512xi32>
    %348 = arith.addi %1, %347 : vector<1x512xi32>
    %c0_i32_174 = arith.constant 0 : i32
    %349 = vector.broadcast %c0_i32_174 : i32 to vector<1x512xi32>
    %350 = arith.cmpi sge, %348, %349 : vector<1x512xi32>
    %351 = arith.andi %346, %350 : vector<1x512xi1>
    %c-1_i32_175 = arith.constant -1 : i32
    %352 = vector.broadcast %c-1_i32_175 : i32 to vector<1x512xi32>
    %353 = arith.addi %1, %352 : vector<1x512xi32>
    %c16_i32_176 = arith.constant 16 : i32
    %354 = vector.broadcast %c16_i32_176 : i32 to vector<1x512xi32>
    %355 = arith.cmpi slt, %353, %354 : vector<1x512xi32>
    %356 = arith.andi %351, %355 : vector<1x512xi1>
    %cst_177 = arith.constant 0.000000e+00 : f32
    %357 = vector.shape_cast %356 : vector<1x512xi1> to vector<1x512xi1>
    %358 = vector.broadcast %357 : vector<1x512xi1> to vector<8x512xi1>
    %359 = vector.broadcast %cst_177 : f32 to vector<8x512xf32>
    %360 = arith.select %358, %337, %359 : vector<8x512xi1>, vector<8x512xf32>
    %c24_178 = arith.constant 24 : index
    %c0_179 = arith.constant 0 : index
    %361 = vector.load %arg13[%c24_178, %c0_179] : memref<72x512xf32, #tpu.memory_space<vmem>>, vector<8x512xf32>
    tpu.vector_store %arg13[%c24_178, %c0_179], %360 {strides = array<i32>} : memref<72x512xf32, #tpu.memory_space<vmem>>, vector<8x512xf32>,
    %c0_180 = arith.constant 0 : index
    %c17_181 = arith.constant 17 : index
    %362 = vector.load %arg12[%c0_180, %c17_181] : memref<8x546xf32, #tpu.memory_space<vmem>>, vector<8x512xf32>
    %c0_i32_182 = arith.constant 0 : i32
    %363 = vector.broadcast %c0_i32_182 : i32 to vector<1x512xi32>
    %364 = arith.addi %0, %363 : vector<1x512xi32>
    %c0_i32_183 = arith.constant 0 : i32
    %365 = vector.broadcast %c0_i32_183 : i32 to vector<1x512xi32>
    %366 = arith.cmpi sge, %364, %365 : vector<1x512xi32>
    %c0_i32_184 = arith.constant 0 : i32
    %367 = vector.broadcast %c0_i32_184 : i32 to vector<1x512xi32>
    %368 = arith.addi %0, %367 : vector<1x512xi32>
    %c16_i32_185 = arith.constant 16 : i32
    %369 = vector.broadcast %c16_i32_185 : i32 to vector<1x512xi32>
    %370 = arith.cmpi slt, %368, %369 : vector<1x512xi32>
    %371 = arith.andi %366, %370 : vector<1x512xi1>
    %c0_i32_186 = arith.constant 0 : i32
    %372 = vector.broadcast %c0_i32_186 : i32 to vector<1x512xi32>
    %373 = arith.addi %1, %372 : vector<1x512xi32>
    %c0_i32_187 = arith.constant 0 : i32
    %374 = vector.broadcast %c0_i32_187 : i32 to vector<1x512xi32>
    %375 = arith.cmpi sge, %373, %374 : vector<1x512xi32>
    %376 = arith.andi %371, %375 : vector<1x512xi1>
    %c0_i32_188 = arith.constant 0 : i32
    %377 = vector.broadcast %c0_i32_188 : i32 to vector<1x512xi32>
    %378 = arith.addi %1, %377 : vector<1x512xi32>
    %c16_i32_189 = arith.constant 16 : i32
    %379 = vector.broadcast %c16_i32_189 : i32 to vector<1x512xi32>
    %380 = arith.cmpi slt, %378, %379 : vector<1x512xi32>
    %381 = arith.andi %376, %380 : vector<1x512xi1>
    %cst_190 = arith.constant 0.000000e+00 : f32
    %382 = vector.shape_cast %381 : vector<1x512xi1> to vector<1x512xi1>
    %383 = vector.broadcast %382 : vector<1x512xi1> to vector<8x512xi1>
    %384 = vector.broadcast %cst_190 : f32 to vector<8x512xf32>
    %385 = arith.select %383, %362, %384 : vector<8x512xi1>, vector<8x512xf32>
    %c32_191 = arith.constant 32 : index
    %c0_192 = arith.constant 0 : index
    %386 = vector.load %arg13[%c32_191, %c0_192] : memref<72x512xf32, #tpu.memory_space<vmem>>, vector<8x512xf32>
    tpu.vector_store %arg13[%c32_191, %c0_192], %385 {strides = array<i32>} : memref<72x512xf32, #tpu.memory_space<vmem>>, vector<8x512xf32>,
    %c0_193 = arith.constant 0 : index
    %c18_194 = arith.constant 18 : index
    %387 = vector.load %arg12[%c0_193, %c18_194] : memref<8x546xf32, #tpu.memory_space<vmem>>, vector<8x512xf32>
    %c0_i32_195 = arith.constant 0 : i32
    %388 = vector.broadcast %c0_i32_195 : i32 to vector<1x512xi32>
    %389 = arith.addi %0, %388 : vector<1x512xi32>
    %c0_i32_196 = arith.constant 0 : i32
    %390 = vector.broadcast %c0_i32_196 : i32 to vector<1x512xi32>
    %391 = arith.cmpi sge, %389, %390 : vector<1x512xi32>
    %c0_i32_197 = arith.constant 0 : i32
    %392 = vector.broadcast %c0_i32_197 : i32 to vector<1x512xi32>
    %393 = arith.addi %0, %392 : vector<1x512xi32>
    %c16_i32_198 = arith.constant 16 : i32
    %394 = vector.broadcast %c16_i32_198 : i32 to vector<1x512xi32>
    %395 = arith.cmpi slt, %393, %394 : vector<1x512xi32>
    %396 = arith.andi %391, %395 : vector<1x512xi1>
    %c1_i32_199 = arith.constant 1 : i32
    %397 = vector.broadcast %c1_i32_199 : i32 to vector<1x512xi32>
    %398 = arith.addi %1, %397 : vector<1x512xi32>
    %c0_i32_200 = arith.constant 0 : i32
    %399 = vector.broadcast %c0_i32_200 : i32 to vector<1x512xi32>
    %400 = arith.cmpi sge, %398, %399 : vector<1x512xi32>
    %401 = arith.andi %396, %400 : vector<1x512xi1>
    %c1_i32_201 = arith.constant 1 : i32
    %402 = vector.broadcast %c1_i32_201 : i32 to vector<1x512xi32>
    %403 = arith.addi %1, %402 : vector<1x512xi32>
    %c16_i32_202 = arith.constant 16 : i32
    %404 = vector.broadcast %c16_i32_202 : i32 to vector<1x512xi32>
    %405 = arith.cmpi slt, %403, %404 : vector<1x512xi32>
    %406 = arith.andi %401, %405 : vector<1x512xi1>
    %cst_203 = arith.constant 0.000000e+00 : f32
    %407 = vector.shape_cast %406 : vector<1x512xi1> to vector<1x512xi1>
    %408 = vector.broadcast %407 : vector<1x512xi1> to vector<8x512xi1>
    %409 = vector.broadcast %cst_203 : f32 to vector<8x512xf32>
    %410 = arith.select %408, %387, %409 : vector<8x512xi1>, vector<8x512xf32>
    %c40 = arith.constant 40 : index
    %c0_204 = arith.constant 0 : index
    %411 = vector.load %arg13[%c40, %c0_204] : memref<72x512xf32, #tpu.memory_space<vmem>>, vector<8x512xf32>
    tpu.vector_store %arg13[%c40, %c0_204], %410 {strides = array<i32>} : memref<72x512xf32, #tpu.memory_space<vmem>>, vector<8x512xf32>,
    %c0_205 = arith.constant 0 : index
    %c32_206 = arith.constant 32 : index
    %412 = vector.load %arg12[%c0_205, %c32_206] : memref<8x546xf32, #tpu.memory_space<vmem>>, vector<8x512xf32>
    %c1_i32_207 = arith.constant 1 : i32
    %413 = vector.broadcast %c1_i32_207 : i32 to vector<1x512xi32>
    %414 = arith.addi %0, %413 : vector<1x512xi32>
    %c0_i32_208 = arith.constant 0 : i32
    %415 = vector.broadcast %c0_i32_208 : i32 to vector<1x512xi32>
    %416 = arith.cmpi sge, %414, %415 : vector<1x512xi32>
    %c1_i32_209 = arith.constant 1 : i32
    %417 = vector.broadcast %c1_i32_209 : i32 to vector<1x512xi32>
    %418 = arith.addi %0, %417 : vector<1x512xi32>
    %c16_i32_210 = arith.constant 16 : i32
    %419 = vector.broadcast %c16_i32_210 : i32 to vector<1x512xi32>
    %420 = arith.cmpi slt, %418, %419 : vector<1x512xi32>
    %421 = arith.andi %416, %420 : vector<1x512xi1>
    %c-1_i32_211 = arith.constant -1 : i32
    %422 = vector.broadcast %c-1_i32_211 : i32 to vector<1x512xi32>
    %423 = arith.addi %1, %422 : vector<1x512xi32>
    %c0_i32_212 = arith.constant 0 : i32
    %424 = vector.broadcast %c0_i32_212 : i32 to vector<1x512xi32>
    %425 = arith.cmpi sge, %423, %424 : vector<1x512xi32>
    %426 = arith.andi %421, %425 : vector<1x512xi1>
    %c-1_i32_213 = arith.constant -1 : i32
    %427 = vector.broadcast %c-1_i32_213 : i32 to vector<1x512xi32>
    %428 = arith.addi %1, %427 : vector<1x512xi32>
    %c16_i32_214 = arith.constant 16 : i32
    %429 = vector.broadcast %c16_i32_214 : i32 to vector<1x512xi32>
    %430 = arith.cmpi slt, %428, %429 : vector<1x512xi32>
    %431 = arith.andi %426, %430 : vector<1x512xi1>
    %cst_215 = arith.constant 0.000000e+00 : f32
    %432 = vector.shape_cast %431 : vector<1x512xi1> to vector<1x512xi1>
    %433 = vector.broadcast %432 : vector<1x512xi1> to vector<8x512xi1>
    %434 = vector.broadcast %cst_215 : f32 to vector<8x512xf32>
    %435 = arith.select %433, %412, %434 : vector<8x512xi1>, vector<8x512xf32>
    %c48 = arith.constant 48 : index
    %c0_216 = arith.constant 0 : index
    %436 = vector.load %arg13[%c48, %c0_216] : memref<72x512xf32, #tpu.memory_space<vmem>>, vector<8x512xf32>
    tpu.vector_store %arg13[%c48, %c0_216], %435 {strides = array<i32>} : memref<72x512xf32, #tpu.memory_space<vmem>>, vector<8x512xf32>,
    %c0_217 = arith.constant 0 : index
    %c33_218 = arith.constant 33 : index
    %437 = vector.load %arg12[%c0_217, %c33_218] : memref<8x546xf32, #tpu.memory_space<vmem>>, vector<8x512xf32>
    %c1_i32_219 = arith.constant 1 : i32
    %438 = vector.broadcast %c1_i32_219 : i32 to vector<1x512xi32>
    %439 = arith.addi %0, %438 : vector<1x512xi32>
    %c0_i32_220 = arith.constant 0 : i32
    %440 = vector.broadcast %c0_i32_220 : i32 to vector<1x512xi32>
    %441 = arith.cmpi sge, %439, %440 : vector<1x512xi32>
    %c1_i32_221 = arith.constant 1 : i32
    %442 = vector.broadcast %c1_i32_221 : i32 to vector<1x512xi32>
    %443 = arith.addi %0, %442 : vector<1x512xi32>
    %c16_i32_222 = arith.constant 16 : i32
    %444 = vector.broadcast %c16_i32_222 : i32 to vector<1x512xi32>
    %445 = arith.cmpi slt, %443, %444 : vector<1x512xi32>
    %446 = arith.andi %441, %445 : vector<1x512xi1>
    %c0_i32_223 = arith.constant 0 : i32
    %447 = vector.broadcast %c0_i32_223 : i32 to vector<1x512xi32>
    %448 = arith.addi %1, %447 : vector<1x512xi32>
    %c0_i32_224 = arith.constant 0 : i32
    %449 = vector.broadcast %c0_i32_224 : i32 to vector<1x512xi32>
    %450 = arith.cmpi sge, %448, %449 : vector<1x512xi32>
    %451 = arith.andi %446, %450 : vector<1x512xi1>
    %c0_i32_225 = arith.constant 0 : i32
    %452 = vector.broadcast %c0_i32_225 : i32 to vector<1x512xi32>
    %453 = arith.addi %1, %452 : vector<1x512xi32>
    %c16_i32_226 = arith.constant 16 : i32
    %454 = vector.broadcast %c16_i32_226 : i32 to vector<1x512xi32>
    %455 = arith.cmpi slt, %453, %454 : vector<1x512xi32>
    %456 = arith.andi %451, %455 : vector<1x512xi1>
    %cst_227 = arith.constant 0.000000e+00 : f32
    %457 = vector.shape_cast %456 : vector<1x512xi1> to vector<1x512xi1>
    %458 = vector.broadcast %457 : vector<1x512xi1> to vector<8x512xi1>
    %459 = vector.broadcast %cst_227 : f32 to vector<8x512xf32>
    %460 = arith.select %458, %437, %459 : vector<8x512xi1>, vector<8x512xf32>
    %c56 = arith.constant 56 : index
    %c0_228 = arith.constant 0 : index
    %461 = vector.load %arg13[%c56, %c0_228] : memref<72x512xf32, #tpu.memory_space<vmem>>, vector<8x512xf32>
    tpu.vector_store %arg13[%c56, %c0_228], %460 {strides = array<i32>} : memref<72x512xf32, #tpu.memory_space<vmem>>, vector<8x512xf32>,
    %c0_229 = arith.constant 0 : index
    %c34_230 = arith.constant 34 : index
    %462 = vector.load %arg12[%c0_229, %c34_230] : memref<8x546xf32, #tpu.memory_space<vmem>>, vector<8x512xf32>
    %c1_i32_231 = arith.constant 1 : i32
    %463 = vector.broadcast %c1_i32_231 : i32 to vector<1x512xi32>
    %464 = arith.addi %0, %463 : vector<1x512xi32>
    %c0_i32_232 = arith.constant 0 : i32
    %465 = vector.broadcast %c0_i32_232 : i32 to vector<1x512xi32>
    %466 = arith.cmpi sge, %464, %465 : vector<1x512xi32>
    %c1_i32_233 = arith.constant 1 : i32
    %467 = vector.broadcast %c1_i32_233 : i32 to vector<1x512xi32>
    %468 = arith.addi %0, %467 : vector<1x512xi32>
    %c16_i32_234 = arith.constant 16 : i32
    %469 = vector.broadcast %c16_i32_234 : i32 to vector<1x512xi32>
    %470 = arith.cmpi slt, %468, %469 : vector<1x512xi32>
    %471 = arith.andi %466, %470 : vector<1x512xi1>
    %c1_i32_235 = arith.constant 1 : i32
    %472 = vector.broadcast %c1_i32_235 : i32 to vector<1x512xi32>
    %473 = arith.addi %1, %472 : vector<1x512xi32>
    %c0_i32_236 = arith.constant 0 : i32
    %474 = vector.broadcast %c0_i32_236 : i32 to vector<1x512xi32>
    %475 = arith.cmpi sge, %473, %474 : vector<1x512xi32>
    %476 = arith.andi %471, %475 : vector<1x512xi1>
    %c1_i32_237 = arith.constant 1 : i32
    %477 = vector.broadcast %c1_i32_237 : i32 to vector<1x512xi32>
    %478 = arith.addi %1, %477 : vector<1x512xi32>
    %c16_i32_238 = arith.constant 16 : i32
    %479 = vector.broadcast %c16_i32_238 : i32 to vector<1x512xi32>
    %480 = arith.cmpi slt, %478, %479 : vector<1x512xi32>
    %481 = arith.andi %476, %480 : vector<1x512xi1>
    %cst_239 = arith.constant 0.000000e+00 : f32
    %482 = vector.shape_cast %481 : vector<1x512xi1> to vector<1x512xi1>
    %483 = vector.broadcast %482 : vector<1x512xi1> to vector<8x512xi1>
    %484 = vector.broadcast %cst_239 : f32 to vector<8x512xf32>
    %485 = arith.select %483, %462, %484 : vector<8x512xi1>, vector<8x512xf32>
    %c64 = arith.constant 64 : index
    %c0_240 = arith.constant 0 : index
    %486 = vector.load %arg13[%c64, %c0_240] : memref<72x512xf32, #tpu.memory_space<vmem>>, vector<8x512xf32>
    tpu.vector_store %arg13[%c64, %c0_240], %485 {strides = array<i32>} : memref<72x512xf32, #tpu.memory_space<vmem>>, vector<8x512xf32>,
    %c0_241 = arith.constant 0 : index
    %c0_242 = arith.constant 0 : index
    %487 = vector.load %arg6[%c0_241, %c0_242] : memref<8x72xf32, #tpu.memory_space<vmem>>, vector<8x72xf32>
    %c0_243 = arith.constant 0 : index
    %c0_244 = arith.constant 0 : index
    %488 = vector.load %arg13[%c0_243, %c0_244] : memref<72x512xf32, #tpu.memory_space<vmem>>, vector<72x512xf32>
    %cst_245 = arith.constant dense<0.000000e+00> : vector<8x512xf32>
    %489 = tpu.matmul %487, %488, %cst_245 {dimension_numbers = #tpu.dot_dimension_numbers<[1], [0], [0], [1], [0, 0, 1, 1], [], []>} : vector<8x72xf32>, vector<72x512xf32>, vector<8x512xf32> -> vector<8x512xf32>
    %cst_246 = arith.constant dense<0.000000e+00> : vector<8xf32>
    %490 = vector.multi_reduction <add>, %489, %cst_246 [1] : vector<8x512xf32> to vector<8xf32>
    %491 = vector.shape_cast %490 : vector<8xf32> to vector<8x1xf32>
    %cst_247 = arith.constant 5.120000e+02 : f32
    %492 = vector.broadcast %cst_247 : f32 to vector<8x1xf32>
    %493 = arith.divf %491, %492 : vector<8x1xf32>
    %494 = vector.broadcast %493 : vector<8x1xf32> to vector<8x512xf32>
    %495 = arith.subf %489, %494 : vector<8x512xf32>
    %496 = arith.mulf %495, %495 : vector<8x512xf32>
    %cst_248 = arith.constant dense<0.000000e+00> : vector<8xf32>
    %497 = vector.multi_reduction <add>, %496, %cst_248 [1] : vector<8x512xf32> to vector<8xf32>
    %498 = vector.shape_cast %497 : vector<8xf32> to vector<8x1xf32>
    %cst_249 = arith.constant 5.120000e+02 : f32
    %499 = vector.broadcast %cst_249 : f32 to vector<8x1xf32>
    %500 = arith.divf %498, %499 : vector<8x1xf32>
    %c0_250 = arith.constant 0 : index
    %c0_251 = arith.constant 0 : index
    %501 = vector.load %arg7[%c0_250, %c0_251] : memref<8x1xf32, #tpu.memory_space<vmem>>, vector<8x1xf32>
    %cst_252 = arith.constant 9.99999974E-6 : f32
    %502 = vector.broadcast %cst_252 : f32 to vector<8x1xf32>
    %503 = arith.addf %500, %502 : vector<8x1xf32>
    %504 = math.rsqrt %503 : vector<8x1xf32>
    %505 = arith.mulf %501, %504 : vector<8x1xf32>
    %c0_253 = arith.constant 0 : index
    %c0_254 = arith.constant 0 : index
    %506 = vector.load %arg8[%c0_253, %c0_254] : memref<8x1xf32, #tpu.memory_space<vmem>>, vector<8x1xf32>
    %507 = arith.mulf %493, %505 : vector<8x1xf32>
    %508 = arith.subf %506, %507 : vector<8x1xf32>
    %509 = vector.broadcast %505 : vector<8x1xf32> to vector<8x512xf32>
    %510 = arith.mulf %489, %509 : vector<8x512xf32>
    %511 = vector.broadcast %508 : vector<8x1xf32> to vector<8x512xf32>
    %512 = arith.addf %510, %511 : vector<8x512xf32>
    %cst_255 = arith.constant 0.000000e+00 : f32
    %513 = vector.broadcast %cst_255 : f32 to vector<8x512xf32>
    %514 = arith.maximumf %512, %513 : vector<8x512xf32>
    %c0_256 = arith.constant 0 : index
    %c0_257 = arith.constant 0 : index
    %515 = vector.load %arg9[%c0_256, %c0_257] : memref<8x512xf32, #tpu.memory_space<vmem>>, vector<8x512xf32>
    tpu.vector_store %arg9[%c0_256, %c0_257], %514 {strides = array<i32>} : memref<8x512xf32, #tpu.memory_space<vmem>>, vector<8x512xf32>,
    return
  }
}

</mosaic_0001>

<llo_original>
// kernel: double_conv_forward.1
$region0: #{double_conv_forward.1}
  #allocation0 [shape = 'u32[]', space=smem, size = 0x4, offset = 0x4, fixed_abs, tag = 'smem constant byte address 0x4 - core index']
  #allocation1 [shape = 'u32[144,128]{1,0:T(1,128)}', space=vmem, size = 0x12000, scoped, tag = 'internal scratch']
  #allocation2 [shape = 'f32[4,546]{1,0:T(4,128)}', space=vmem, size = 0x2800, scoped, tag = 'scratch operand']
  #allocation3 [shape = 'f32[36,512]{1,0:T(8,128)}', space=vmem, size = 0x14000, scoped, tag = 'scratch operand']
  #allocation4 [shape = 'f32[8,546]{1,0:T(8,128)}', space=vmem, size = 0x5000, scoped, tag = 'scratch operand']
  #allocation5 [shape = 'f32[72,512]{1,0:T(8,128)}', space=vmem, size = 0x24000, scoped, tag = 'scratch operand']
  %s0 = inlined_call_operand.vmem [shape: f32[4,512], index: 0, kind: input, shape index: {}]
  %s1 = inlined_call_operand.vmem [shape: s32[1,512], index: 1, kind: input, shape index: {}]
  %s2 = inlined_call_operand.vmem [shape: s32[1,512], index: 2, kind: input, shape index: {}]
  %s3 = inlined_call_operand.vmem [shape: f32[8,36], index: 3, kind: input, shape index: {}]
  %s4 = inlined_call_operand.vmem [shape: f32[8,1], index: 4, kind: input, shape index: {}]
  %s5 = inlined_call_operand.vmem [shape: f32[8,1], index: 5, kind: input, shape index: {}]
  %s6 = inlined_call_operand.vmem [shape: f32[8,72], index: 6, kind: input, shape index: {}]
  %s7 = inlined_call_operand.vmem [shape: f32[8,1], index: 7, kind: input, shape index: {}]
  %s8 = inlined_call_operand.vmem [shape: f32[8,1], index: 8, kind: input, shape index: {}]
  %s9 = inlined_call_operand.vmem [shape: f32[8,512], index: 9, kind: output, shape index: {}]
  %s10 = sld [smem:[#allocation0]]
  $region46: #{double_conv_forward.1} parent=0
    _
  %s12 = ssub.s32 1, %s10
  %s13 = scalar_select 0, %s12, %s10
  // Predicated region
  $region2: #{double_conv_forward.1} parent=0 // pred_check
    _
  $region3: #{double_conv_forward.1} parent=0 // pred_check_branch
    %15 = sbr.rel (0) target = $region5
  $region4: #{double_conv_forward.1} parent=0 // pred_region
    _
  $region5: #{double_conv_forward.1} parent=0 // pred_fallthru
    _
  // Predicated region
  $region6: #{double_conv_forward.1} parent=0 // pred_check
    _
  $region7: #{double_conv_forward.1} parent=0 // pred_check_branch
    %17 = sbr.rel (0) target = $region9
  $region8: #{double_conv_forward.1} parent=0 // pred_region
    _
  $region9: #{double_conv_forward.1} parent=0 // pred_fallthru
    _
  // Predicated region
  $region10: #{double_conv_forward.1} parent=0 // pred_check
    _
  $region11: #{double_conv_forward.1} parent=0 // pred_check_branch
    %19 = sbr.rel (0) target = $region13
  $region12: #{double_conv_forward.1} parent=0 // pred_region
    _
  $region13: #{double_conv_forward.1} parent=0 // pred_fallthru
    _
  // Predicated region
  $region14: #{double_conv_forward.1} parent=0 // pred_check
    _
  $region15: #{double_conv_forward.1} parent=0 // pred_check_branch
    %21 = sbr.rel (0) target = $region17
  $region16: #{double_conv_forward.1} parent=0 // pred_region
    _
  $region17: #{double_conv_forward.1} parent=0 // pred_fallthru
    _
  // Predicated region
  $region18: #{double_conv_forward.1} parent=0 // pred_check
    _
  $region19: #{double_conv_forward.1} parent=0 // pred_check_branch
    %23 = sbr.rel (0) target = $region21
  $region20: #{double_conv_forward.1} parent=0 // pred_region
    _
  $region21: #{double_conv_forward.1} parent=0 // pred_fallthru
    _
  // Predicated region
  $region22: #{double_conv_forward.1} parent=0 // pred_check
    _
  $region23: #{double_conv_forward.1} parent=0 // pred_check_branch
    %25 = sbr.rel (0) target = $region25
  $region24: #{double_conv_forward.1} parent=0 // pred_region
    _
  $region25: #{double_conv_forward.1} parent=0 // pred_fallthru
    _
  // Predicated region
  $region26: #{double_conv_forward.1} parent=0 // pred_check
    _
  $region27: #{double_conv_forward.1} parent=0 // pred_check_branch
    %27 = sbr.rel (0) target = $region29
  $region28: #{double_conv_forward.1} parent=0 // pred_region
    _
  $region29: #{double_conv_forward.1} parent=0 // pred_fallthru
    _
  // Predicated region
  $region30: #{double_conv_forward.1} parent=0 // pred_check
    _
  $region31: #{double_conv_forward.1} parent=0 // pred_check_branch
    %29 = sbr.rel (0) target = $region33
  $region32: #{double_conv_forward.1} parent=0 // pred_region
    _
  $region33: #{double_conv_forward.1} parent=0 // pred_fallthru
    _
  // Predicated region
  $region34: #{double_conv_forward.1} parent=0 // pred_check
    _
  $region35: #{double_conv_forward.1} parent=0 // pred_check_branch
    %31 = sbr.rel (0) target = $region37
  $region36: #{double_conv_forward.1} parent=0 // pred_region
    _
  $region37: #{double_conv_forward.1} parent=0 // pred_fallthru
    _
  %v32 = vld [vmem:[%s1] sm:$0xf]
  %v33 = vld [vmem:[%s2] sm:$0xf]
  %v34 = vld [vmem:[%s0] sm:$0xff]
  %v35 = vld [vmem:[%s0 + $0x8] sm:$0xff]
  %36 = vst [vmem:[#allocation2] sm:$0xff] 0.0
  %37 = vst [vmem:[#allocation2 + $0x8] sm:$0xff] 0.0
  %vm38 = vcmask 273408
  %39 = vst.msk [vmem:[#allocation2 + $0x10] sm:$0xf] %vm38, 0.0
  %42 = vrot.lane.b32.xlu0 %v34, 17
  %v43 = vpop.permute.xlu0 %42
  %44 = vrot.lane.b32.xlu0 %v35, 17
  %v45 = vpop.permute.xlu0 %44
  %v46 = vrot.slane %v43, 4
  %v47 = vrot.slane %v45, 4
  %vm48 = vcmask 138240
  %v49 = vsel %vm48, %v46, %v43
  %vm50 = vcmask 1043456
  %v51 = vsel %vm50, %v46, %v47
  %v52 = vsel %vm48, %v51, %v45
  %vm56 = vcmask 1043592
  %vm57 = vcmask 1047556
  %vm58 = vmor %vm57, %vm56
  %59 = vst.msk [vmem:[#allocation2] sm:$0xff] %vm58, %v49
  %60 = vst [vmem:[#allocation2 + $0x8] sm:$0xff] %v52
  %vm61 = vcmask 134144
  %62 = vst.msk [vmem:[#allocation2 + $0x10] sm:$0xf] %vm61, %v47
  %v63 = vld [vmem:[#allocation2] sm:$0xff]
  %v64 = vld [vmem:[#allocation2 + $0x8] sm:$0xff]
  %v65 = vadd.s32 %v32, 4294967295
  %vm66 = vcmp.ge.s32.totalorder %v65, 0
  %vm67 = vcmp.lt.s32.totalorder %v65, 16
  %vm68 = vmand %vm66, %vm67
  %v69 = vadd.s32 %v33, 4294967295
  %vm70 = vcmp.ge.s32.totalorder %v69, 0
  %vm71 = vmand %vm68, %vm70
  %vm72 = vcmp.lt.s32.totalorder %v69, 16
  %vm73 = vmand %vm71, %vm72
  %v74 = vsel %vm73, 1, 0
  %v75 = vlaneseq
  %v76 = vshrl.u32 %v75, 7
  %v77 = vsub.s32 0, %v76
  %v78 = vrot.slane %v74, %v77
  %v79 = vlaneseq
  %v80 = vshrl.u32 %v79, 7
  %v81 = vsub.s32 1, %v80
  %v82 = vrot.slane %v74, %v81
  %v83 = vlaneseq
  %v84 = vshrl.u32 %v83, 7
  %v85 = vsub.s32 2, %v84
  %v86 = vrot.slane %v74, %v85
  %v87 = vlaneseq
  %v88 = vshrl.u32 %v87, 7
  %v89 = vsub.s32 3, %v88
  %v90 = vrot.slane %v74, %v89
  %vm91 = vcmp.eq.s32.totalorder %v78, 1
  %vm92 = vcmp.eq.s32.totalorder %v82, 1
  %vm93 = vcmp.eq.s32.totalorder %v86, 1
  %vm94 = vcmp.eq.s32.totalorder %v90, 1
  %v97 = vcombine.high %v63, %v63
  %v98 = vcombine.high %v64, %v64
  %v101 = vsel %vm91, %v63, 0.0
  %v102 = vsel %vm92, %v97, 0.0
  %v103 = vsel %vm93, %v64, 0.0
  %v104 = vsel %vm94, %v98, 0.0
  %105 = vst [vmem:[#allocation3] sm:$0xf] %v101
  %106 = vst [vmem:[#allocation3 + $0x8] sm:$0xf] %v102
  %107 = vst [vmem:[#allocation3 + $0x10] sm:$0xf] %v103
  %108 = vst [vmem:[#allocation3 + $0x18] sm:$0xf] %v104
  %v109 = vld [vmem:[#allocation2] sm:$0xff]
  %v110 = vld [vmem:[#allocation2 + $0x8] sm:$0xff]
  %v111 = vld [vmem:[#allocation2 + $0x10] sm:$0xf]
  %vm112 = vcmp.ge.s32.totalorder %v33, 0
  %vm113 = vmand %vm68, %vm112
  %vm114 = vcmp.lt.s32.totalorder %v33, 16
  %vm115 = vmand %vm113, %vm114
  %v116 = vsel %vm115, 1, 0
  %v117 = vlaneseq
  %v118 = vshrl.u32 %v117, 7
  %v119 = vsub.s32 0, %v118
  %v120 = vrot.slane %v116, %v119
  %v121 = vlaneseq
  %v122 = vshrl.u32 %v121, 7
  %v123 = vsub.s32 1, %v122
  %v124 = vrot.slane %v116, %v123
  %v125 = vlaneseq
  %v126 = vshrl.u32 %v125, 7
  %v127 = vsub.s32 2, %v126
  %v128 = vrot.slane %v116, %v127
  %v129 = vlaneseq
  %v130 = vshrl.u32 %v129, 7
  %v131 = vsub.s32 3, %v130
  %v132 = vrot.slane %v116, %v131
  %vm133 = vcmp.eq.s32.totalorder %v120, 1
  %vm134 = vcmp.eq.s32.totalorder %v124, 1
  %vm135 = vcmp.eq.s32.totalorder %v128, 1
  %vm136 = vcmp.eq.s32.totalorder %v132, 1
  %v140 = vcombine.high %v109, %v109
  %v141 = vcombine.high %v110, %v110
  %142 = vrot.lane.b32.xlu0 %v109, 127
  %v143 = vpop.permute.xlu0 %142
  %144 = vrot.lane.b32.xlu0 %v140, 127
  %v145 = vpop.permute.xlu0 %144
  %146 = vrot.lane.b32.xlu0 %v110, 127
  %v147 = vpop.permute.xlu0 %146
  %148 = vrot.lane.b32.xlu0 %v141, 127
  %v149 = vpop.permute.xlu0 %148
  %150 = vrot.lane.b32.xlu0 %v111, 127
  %v151 = vpop.permute.xlu0 %150
  %vm152 = vcmask 1039360
  %v153 = vsel %vm152, %v143, %v145
  %v154 = vsel %vm152, %v145, %v147
  %v155 = vsel %vm152, %v147, %v149
  %v156 = vsel %vm152, %v149, %v151
  %v161 = vsel %vm133, %v153, 0.0
  %v162 = vsel %vm134, %v154, 0.0
  %v163 = vsel %vm135, %v155, 0.0
  %v164 = vsel %vm136, %v156, 0.0
  %v169 = vrot.slane %v161, 4
  %v170 = vrot.slane %v162, 4
  %v171 = vrot.slane %v163, 4
  %v172 = vrot.slane %v164, 4
  %177 = vst [vmem:[#allocation3] sm:$0xf0] %v169
  %178 = vst [vmem:[#allocation3 + $0x8] sm:$0xf0] %v170
  %179 = vst [vmem:[#allocation3 + $0x10] sm:$0xf0] %v171
  %180 = vst [vmem:[#allocation3 + $0x18] sm:$0xf0] %v172
  %v181 = vld [vmem:[#allocation2] sm:$0xff]
  %v182 = vld [vmem:[#allocation2 + $0x8] sm:$0xff]
  %v183 = vld [vmem:[#allocation2 + $0x10] sm:$0xf]
  %v184 = vadd.s32 %v33, 1
  %vm185 = vcmp.ge.s32.totalorder %v184, 0
  %vm186 = vmand %vm68, %vm185
  %vm187 = vcmp.lt.s32.totalorder %v184, 16
  %vm188 = vmand %vm186, %vm187
  %v189 = vsel %vm188, 1, 0
  %v190 = vlaneseq
  %v191 = vshrl.u32 %v190, 7
  %v192 = vsub.s32 0, %v191
  %v193 = vrot.slane %v189, %v192
  %v194 = vlaneseq
  %v195 = vshrl.u32 %v194, 7
  %v196 = vsub.s32 1, %v195
  %v197 = vrot.slane %v189, %v196
  %v198 = vlaneseq
  %v199 = vshrl.u32 %v198, 7
  %v200 = vsub.s32 2, %v199
  %v201 = vrot.slane %v189, %v200
  %v202 = vlaneseq
  %v203 = vshrl.u32 %v202, 7
  %v204 = vsub.s32 3, %v203
  %v205 = vrot.slane %v189, %v204
  %vm206 = vcmp.eq.s32.totalorder %v193, 1
  %vm207 = vcmp.eq.s32.totalorder %v197, 1
  %vm208 = vcmp.eq.s32.totalorder %v201, 1
  %vm209 = vcmp.eq.s32.totalorder %v205, 1
  %v213 = vcombine.high %v181, %v181
  %v214 = vcombine.high %v182, %v182
  %215 = vrot.lane.b32.xlu0 %v181, 126
  %v216 = vpop.permute.xlu0 %215
  %217 = vrot.lane.b32.xlu0 %v213, 126
  %v218 = vpop.permute.xlu0 %217
  %219 = vrot.lane.b32.xlu0 %v182, 126
  %v220 = vpop.permute.xlu0 %219
  %221 = vrot.lane.b32.xlu0 %v214, 126
  %v222 = vpop.permute.xlu0 %221
  %223 = vrot.lane.b32.xlu0 %v183, 126
  %v224 = vpop.permute.xlu0 %223
  %vm225 = vcmask 1031168
  %v226 = vsel %vm225, %v216, %v218
  %v227 = vsel %vm225, %v218, %v220
  %v228 = vsel %vm225, %v220, %v222
  %v229 = vsel %vm225, %v222, %v224
  %v234 = vsel %vm206, %v226, 0.0
  %v235 = vsel %vm207, %v227, 0.0
  %v236 = vsel %vm208, %v228, 0.0
  %v237 = vsel %vm209, %v229, 0.0
  %238 = vst [vmem:[#allocation3 + $0x20] sm:$0xf] %v234
  %239 = vst [vmem:[#allocation3 + $0x28] sm:$0xf] %v235
  %240 = vst [vmem:[#allocation3 + $0x30] sm:$0xf] %v236
  %241 = vst [vmem:[#allocation3 + $0x38] sm:$0xf] %v237
  %v242 = vld [vmem:[#allocation2] sm:$0xff]
  %v243 = vld [vmem:[#allocation2 + $0x8] sm:$0xff]
  %v244 = vld [vmem:[#allocation2 + $0x10] sm:$0xf]
  %vm245 = vcmp.ge.s32.totalorder %v32, 0
  %vm246 = vcmp.lt.s32.totalorder %v32, 16
  %vm247 = vmand %vm245, %vm246
  %vm248 = vmand %vm247, %vm70
  %vm249 = vmand %vm248, %vm72
  %v250 = vsel %vm249, 1, 0
  %v251 = vlaneseq
  %v252 = vshrl.u32 %v251, 7
  %v253 = vsub.s32 0, %v252
  %v254 = vrot.slane %v250, %v253
  %v255 = vlaneseq
  %v256 = vshrl.u32 %v255, 7
  %v257 = vsub.s32 1, %v256
  %v258 = vrot.slane %v250, %v257
  %v259 = vlaneseq
  %v260 = vshrl.u32 %v259, 7
  %v261 = vsub.s32 2, %v260
  %v262 = vrot.slane %v250, %v261
  %v263 = vlaneseq
  %v264 = vshrl.u32 %v263, 7
  %v265 = vsub.s32 3, %v264
  %v266 = vrot.slane %v250, %v265
  %vm267 = vcmp.eq.s32.totalorder %v254, 1
  %vm268 = vcmp.eq.s32.totalorder %v258, 1
  %vm269 = vcmp.eq.s32.totalorder %v262, 1
  %vm270 = vcmp.eq.s32.totalorder %v266, 1
  %v274 = vcombine.high %v242, %v242
  %v275 = vcombine.high %v243, %v243
  %276 = vrot.lane.b32.xlu0 %v242, 112
  %v277 = vpop.permute.xlu0 %276
  %278 = vrot.lane.b32.xlu0 %v274, 112
  %v279 = vpop.permute.xlu0 %278
  %280 = vrot.lane.b32.xlu0 %v243, 112
  %v281 = vpop.permute.xlu0 %280
  %282 = vrot.lane.b32.xlu0 %v275, 112
  %v283 = vpop.permute.xlu0 %282
  %284 = vrot.lane.b32.xlu0 %v244, 112
  %v285 = vpop.permute.xlu0 %284
  %vm286 = vcmask 916480
  %v287 = vsel %vm286, %v277, %v279
  %v288 = vsel %vm286, %v279, %v281
  %v289 = vsel %vm286, %v281, %v283
  %v290 = vsel %vm286, %v283, %v285
  %v295 = vsel %vm267, %v287, 0.0
  %v296 = vsel %vm268, %v288, 0.0
  %v297 = vsel %vm269, %v289, 0.0
  %v298 = vsel %vm270, %v290, 0.0
  %v303 = vrot.slane %v295, 4
  %v304 = vrot.slane %v296, 4
  %v305 = vrot.slane %v297, 4
  %v306 = vrot.slane %v298, 4
  %311 = vst [vmem:[#allocation3 + $0x20] sm:$0xf0] %v303
  %312 = vst [vmem:[#allocation3 + $0x28] sm:$0xf0] %v304
  %313 = vst [vmem:[#allocation3 + $0x30] sm:$0xf0] %v305
  %314 = vst [vmem:[#allocation3 + $0x38] sm:$0xf0] %v306
  %v315 = vld [vmem:[#allocation2] sm:$0xff]
  %v316 = vld [vmem:[#allocation2 + $0x8] sm:$0xff]
  %v317 = vld [vmem:[#allocation2 + $0x10] sm:$0xf]
  %vm318 = vmand %vm247, %vm112
  %vm319 = vmand %vm318, %vm114
  %v320 = vsel %vm319, 1, 0
  %v321 = vlaneseq
  %v322 = vshrl.u32 %v321, 7
  %v323 = vsub.s32 0, %v322
  %v324 = vrot.slane %v320, %v323
  %v325 = vlaneseq
  %v326 = vshrl.u32 %v325, 7
  %v327 = vsub.s32 1, %v326
  %v328 = vrot.slane %v320, %v327
  %v329 = vlaneseq
  %v330 = vshrl.u32 %v329, 7
  %v331 = vsub.s32 2, %v330
  %v332 = vrot.slane %v320, %v331
  %v333 = vlaneseq
  %v334 = vshrl.u32 %v333, 7
  %v335 = vsub.s32 3, %v334
  %v336 = vrot.slane %v320, %v335
  %vm337 = vcmp.eq.s32.totalorder %v324, 1
  %vm338 = vcmp.eq.s32.totalorder %v328, 1
  %vm339 = vcmp.eq.s32.totalorder %v332, 1
  %vm340 = vcmp.eq.s32.totalorder %v336, 1
  %v344 = vcombine.high %v315, %v315
  %v345 = vcombine.high %v316, %v316
  %346 = vrot.lane.b32.xlu0 %v315, 111
  %v347 = vpop.permute.xlu0 %346
  %348 = vrot.lane.b32.xlu0 %v344, 111
  %v349 = vpop.permute.xlu0 %348
  %350 = vrot.lane.b32.xlu0 %v316, 111
  %v351 = vpop.permute.xlu0 %350
  %352 = vrot.lane.b32.xlu0 %v345, 111
  %v353 = vpop.permute.xlu0 %352
  %354 = vrot.lane.b32.xlu0 %v317, 111
  %v355 = vpop.permute.xlu0 %354
  %vm356 = vcmask 908288
  %v357 = vsel %vm356, %v347, %v349
  %v358 = vsel %vm356, %v349, %v351
  %v359 = vsel %vm356, %v351, %v353
  %v360 = vsel %vm356, %v353, %v355
  %v365 = vsel %vm337, %v357, 0.0
  %v366 = vsel %vm338, %v358, 0.0
  %v367 = vsel %vm339, %v359, 0.0
  %v368 = vsel %vm340, %v360, 0.0
  %369 = vst [vmem:[#allocation3 + $0x40] sm:$0xf] %v365
  %370 = vst [vmem:[#allocation3 + $0x48] sm:$0xf] %v366
  %371 = vst [vmem:[#allocation3 + $0x50] sm:$0xf] %v367
  %372 = vst [vmem:[#allocation3 + $0x58] sm:$0xf] %v368
  %v373 = vld [vmem:[#allocation2] sm:$0xff]
  %v374 = vld [vmem:[#allocation2 + $0x8] sm:$0xff]
  %v375 = vld [vmem:[#allocation2 + $0x10] sm:$0xf]
  %vm376 = vmand %vm247, %vm185
  %vm377 = vmand %vm376, %vm187
  %v378 = vsel %vm377, 1, 0
  %v379 = vlaneseq
  %v380 = vshrl.u32 %v379, 7
  %v381 = vsub.s32 0, %v380
  %v382 = vrot.slane %v378, %v381
  %v383 = vlaneseq
  %v384 = vshrl.u32 %v383, 7
  %v385 = vsub.s32 1, %v384
  %v386 = vrot.slane %v378, %v385
  %v387 = vlaneseq
  %v388 = vshrl.u32 %v387, 7
  %v389 = vsub.s32 2, %v388
  %v390 = vrot.slane %v378, %v389
  %v391 = vlaneseq
  %v392 = vshrl.u32 %v391, 7
  %v393 = vsub.s32 3, %v392
  %v394 = vrot.slane %v378, %v393
  %vm395 = vcmp.eq.s32.totalorder %v382, 1
  %vm396 = vcmp.eq.s32.totalorder %v386, 1
  %vm397 = vcmp.eq.s32.totalorder %v390, 1
  %vm398 = vcmp.eq.s32.totalorder %v394, 1
  %v402 = vcombine.high %v373, %v373
  %v403 = vcombine.high %v374, %v374
  %404 = vrot.lane.b32.xlu0 %v373, 110
  %v405 = vpop.permute.xlu0 %404
  %406 = vrot.lane.b32.xlu0 %v402, 110
  %v407 = vpop.permute.xlu0 %406
  %408 = vrot.lane.b32.xlu0 %v374, 110
  %v409 = vpop.permute.xlu0 %408
  %410 = vrot.lane.b32.xlu0 %v403, 110
  %v411 = vpop.permute.xlu0 %410
  %412 = vrot.lane.b32.xlu0 %v375, 110
  %v413 = vpop.permute.xlu0 %412
  %vm414 = vcmask 900096
  %v415 = vsel %vm414, %v405, %v407
  %v416 = vsel %vm414, %v407, %v409
  %v417 = vsel %vm414, %v409, %v411
  %v418 = vsel %vm414, %v411, %v413
  %v423 = vsel %vm395, %v415, 0.0
  %v424 = vsel %vm396, %v416, 0.0
  %v425 = vsel %vm397, %v417, 0.0
  %v426 = vsel %vm398, %v418, 0.0
  %v431 = vrot.slane %v423, 4
  %v432 = vrot.slane %v424, 4
  %v433 = vrot.slane %v425, 4
  %v434 = vrot.slane %v426, 4
  %439 = vst [vmem:[#allocation3 + $0x40] sm:$0xf0] %v431
  %440 = vst [vmem:[#allocation3 + $0x48] sm:$0xf0] %v432
  %441 = vst [vmem:[#allocation3 + $0x50] sm:$0xf0] %v433
  %442 = vst [vmem:[#allocation3 + $0x58] sm:$0xf0] %v434
  %v443 = vld [vmem:[#allocation2] sm:$0xff]
  %v444 = vld [vmem:[#allocation2 + $0x8] sm:$0xff]
  %v445 = vld [vmem:[#allocation2 + $0x10] sm:$0xf]
  %v446 = vadd.s32 %v32, 1
  %vm447 = vcmp.ge.s32.totalorder %v446, 0
  %vm448 = vcmp.lt.s32.totalorder %v446, 16
  %vm449 = vmand %vm447, %vm448
  %vm450 = vmand %vm449, %vm70
  %vm451 = vmand %vm450, %vm72
  %v452 = vsel %vm451, 1, 0
  %v453 = vlaneseq
  %v454 = vshrl.u32 %v453, 7
  %v455 = vsub.s32 0, %v454
  %v456 = vrot.slane %v452, %v455
  %v457 = vlaneseq
  %v458 = vshrl.u32 %v457, 7
  %v459 = vsub.s32 1, %v458
  %v460 = vrot.slane %v452, %v459
  %v461 = vlaneseq
  %v462 = vshrl.u32 %v461, 7
  %v463 = vsub.s32 2, %v462
  %v464 = vrot.slane %v452, %v463
  %v465 = vlaneseq
  %v466 = vshrl.u32 %v465, 7
  %v467 = vsub.s32 3, %v466
  %v468 = vrot.slane %v452, %v467
  %vm469 = vcmp.eq.s32.totalorder %v456, 1
  %vm470 = vcmp.eq.s32.totalorder %v460, 1
  %vm471 = vcmp.eq.s32.totalorder %v464, 1
  %vm472 = vcmp.eq.s32.totalorder %v468, 1
  %v476 = vcombine.high %v443, %v443
  %v477 = vcombine.high %v444, %v444
  %478 = vrot.lane.b32.xlu0 %v443, 96
  %v479 = vpop.permute.xlu0 %478
  %480 = vrot.lane.b32.xlu0 %v476, 96
  %v481 = vpop.permute.xlu0 %480
  %482 = vrot.lane.b32.xlu0 %v444, 96
  %v483 = vpop.permute.xlu0 %482
  %484 = vrot.lane.b32.xlu0 %v477, 96
  %v485 = vpop.permute.xlu0 %484
  %486 = vrot.lane.b32.xlu0 %v445, 96
  %v487 = vpop.permute.xlu0 %486
  %vm488 = vcmask 785408
  %v489 = vsel %vm488, %v479, %v481
  %v490 = vsel %vm488, %v481, %v483
  %v491 = vsel %vm488, %v483, %v485
  %v492 = vsel %vm488, %v485, %v487
  %v497 = vsel %vm469, %v489, 0.0
  %v498 = vsel %vm470, %v490, 0.0
  %v499 = vsel %vm471, %v491, 0.0
  %v500 = vsel %vm472, %v492, 0.0
  %501 = vst [vmem:[#allocation3 + $0x60] sm:$0xf] %v497
  %502 = vst [vmem:[#allocation3 + $0x68] sm:$0xf] %v498
  %503 = vst [vmem:[#allocation3 + $0x70] sm:$0xf] %v499
  %504 = vst [vmem:[#allocation3 + $0x78] sm:$0xf] %v500
  %v505 = vld [vmem:[#allocation2] sm:$0xff]
  %v506 = vld [vmem:[#allocation2 + $0x8] sm:$0xff]
  %v507 = vld [vmem:[#allocation2 + $0x10] sm:$0xf]
  %vm508 = vmand %vm449, %vm112
  %vm509 = vmand %vm508, %vm114
  %v510 = vsel %vm509, 1, 0
  %v511 = vlaneseq
  %v512 = vshrl.u32 %v511, 7
  %v513 = vsub.s32 0, %v512
  %v514 = vrot.slane %v510, %v513
  %v515 = vlaneseq
  %v516 = vshrl.u32 %v515, 7
  %v517 = vsub.s32 1, %v516
  %v518 = vrot.slane %v510, %v517
  %v519 = vlaneseq
  %v520 = vshrl.u32 %v519, 7
  %v521 = vsub.s32 2, %v520
  %v522 = vrot.slane %v510, %v521
  %v523 = vlaneseq
  %v524 = vshrl.u32 %v523, 7
  %v525 = vsub.s32 3, %v524
  %v526 = vrot.slane %v510, %v525
  %vm527 = vcmp.eq.s32.totalorder %v514, 1
  %vm528 = vcmp.eq.s32.totalorder %v518, 1
  %vm529 = vcmp.eq.s32.totalorder %v522, 1
  %vm530 = vcmp.eq.s32.totalorder %v526, 1
  %v534 = vcombine.high %v505, %v505
  %v535 = vcombine.high %v506, %v506
  %536 = vrot.lane.b32.xlu0 %v505, 95
  %v537 = vpop.permute.xlu0 %536
  %538 = vrot.lane.b32.xlu0 %v534, 95
  %v539 = vpop.permute.xlu0 %538
  %540 = vrot.lane.b32.xlu0 %v506, 95
  %v541 = vpop.permute.xlu0 %540
  %542 = vrot.lane.b32.xlu0 %v535, 95
  %v543 = vpop.permute.xlu0 %542
  %544 = vrot.lane.b32.xlu0 %v507, 95
  %v545 = vpop.permute.xlu0 %544
  %vm546 = vcmask 777216
  %v547 = vsel %vm546, %v537, %v539
  %v548 = vsel %vm546, %v539, %v541
  %v549 = vsel %vm546, %v541, %v543
  %v550 = vsel %vm546, %v543, %v545
  %v555 = vsel %vm527, %v547, 0.0
  %v556 = vsel %vm528, %v548, 0.0
  %v557 = vsel %vm529, %v549, 0.0
  %v558 = vsel %vm530, %v550, 0.0
  %v563 = vrot.slane %v555, 4
  %v564 = vrot.slane %v556, 4
  %v565 = vrot.slane %v557, 4
  %v566 = vrot.slane %v558, 4
  %571 = vst [vmem:[#allocation3 + $0x60] sm:$0xf0] %v563
  %572 = vst [vmem:[#allocation3 + $0x68] sm:$0xf0] %v564
  %573 = vst [vmem:[#allocation3 + $0x70] sm:$0xf0] %v565
  %574 = vst [vmem:[#allocation3 + $0x78] sm:$0xf0] %v566
  %v575 = vld [vmem:[#allocation2] sm:$0xff]
  %v576 = vld [vmem:[#allocation2 + $0x8] sm:$0xff]
  %v577 = vld [vmem:[#allocation2 + $0x10] sm:$0xf]
  %vm578 = vmand %vm449, %vm185
  %vm579 = vmand %vm578, %vm187
  %v580 = vsel %vm579, 1, 0
  %v581 = vlaneseq
  %v582 = vshrl.u32 %v581, 7
  %v583 = vsub.s32 0, %v582
  %v584 = vrot.slane %v580, %v583
  %v585 = vlaneseq
  %v586 = vshrl.u32 %v585, 7
  %v587 = vsub.s32 1, %v586
  %v588 = vrot.slane %v580, %v587
  %v589 = vlaneseq
  %v590 = vshrl.u32 %v589, 7
  %v591 = vsub.s32 2, %v590
  %v592 = vrot.slane %v580, %v591
  %v593 = vlaneseq
  %v594 = vshrl.u32 %v593, 7
  %v595 = vsub.s32 3, %v594
  %v596 = vrot.slane %v580, %v595
  %vm597 = vcmp.eq.s32.totalorder %v584, 1
  %vm598 = vcmp.eq.s32.totalorder %v588, 1
  %vm599 = vcmp.eq.s32.totalorder %v592, 1
  %vm600 = vcmp.eq.s32.totalorder %v596, 1
  %v604 = vcombine.high %v575, %v575
  %v605 = vcombine.high %v576, %v576
  %606 = vrot.lane.b32.xlu0 %v575, 94
  %v607 = vpop.permute.xlu0 %606
  %608 = vrot.lane.b32.xlu0 %v604, 94
  %v609 = vpop.permute.xlu0 %608
  %610 = vrot.lane.b32.xlu0 %v576, 94
  %v611 = vpop.permute.xlu0 %610
  %612 = vrot.lane.b32.xlu0 %v605, 94
  %v613 = vpop.permute.xlu0 %612
  %614 = vrot.lane.b32.xlu0 %v577, 94
  %v615 = vpop.permute.xlu0 %614
  %vm616 = vcmask 769024
  %v617 = vsel %vm616, %v607, %v609
  %v618 = vsel %vm616, %v609, %v611
  %v619 = vsel %vm616, %v611, %v613
  %v620 = vsel %vm616, %v613, %v615
  %v625 = vsel %vm597, %v617, 0.0
  %v626 = vsel %vm598, %v618, 0.0
  %v627 = vsel %vm599, %v619, 0.0
  %v628 = vsel %vm600, %v620, 0.0
  %629 = vst [vmem:[#allocation3 + $0x80] sm:$0xf] %v625
  %630 = vst [vmem:[#allocation3 + $0x88] sm:$0xf] %v626
  %631 = vst [vmem:[#allocation3 + $0x90] sm:$0xf] %v627
  %632 = vst [vmem:[#allocation3 + $0x98] sm:$0xf] %v628
  %v633 = vld [vmem:[%s3] sm:$0xff]
  %v634 = vld [vmem:[#allocation3] sm:$0xff]
  %v635 = vld [vmem:[#allocation3 + $0x8] sm:$0xff]
  %v636 = vld [vmem:[#allocation3 + $0x10] sm:$0xff]
  %v637 = vld [vmem:[#allocation3 + $0x18] sm:$0xff]
  %v638 = vld [vmem:[#allocation3 + $0x20] sm:$0xff]
  %v639 = vld [vmem:[#allocation3 + $0x28] sm:$0xff]
  %v640 = vld [vmem:[#allocation3 + $0x30] sm:$0xff]
  %v641 = vld [vmem:[#allocation3 + $0x38] sm:$0xff]
  %v642 = vld [vmem:[#allocation3 + $0x40] sm:$0xff]
  %v643 = vld [vmem:[#allocation3 + $0x48] sm:$0xff]
  %v644 = vld [vmem:[#allocation3 + $0x50] sm:$0xff]
  %v645 = vld [vmem:[#allocation3 + $0x58] sm:$0xff]
  %v646 = vld [vmem:[#allocation3 + $0x60] sm:$0xff]
  %v647 = vld [vmem:[#allocation3 + $0x68] sm:$0xff]
  %v648 = vld [vmem:[#allocation3 + $0x70] sm:$0xff]
  %v649 = vld [vmem:[#allocation3 + $0x78] sm:$0xff]
  %v650 = vld [vmem:[#allocation3 + $0x80] sm:$0xf]
  %v651 = vld [vmem:[#allocation3 + $0x88] sm:$0xf]
  %v652 = vld [vmem:[#allocation3 + $0x90] sm:$0xf]
  %v653 = vld [vmem:[#allocation3 + $0x98] sm:$0xf]
  %vm654 = vcmask 293888
  %v656 = vsel %vm654, %v633, 0
  %v659 = vsel %vm50, %v650, 0
  %v662 = vsel %vm50, %v651, 0
  %v665 = vsel %vm50, %v652, 0
  %v668 = vsel %vm50, %v653, 0
  %670 = vmatprep.subr.mxu0 %v635
  %671 = vmatpush1.msra.mxu0 %v634
  %672 = vmatprep.subr.mxu0 %v639
  %673 = vmatpush1.msra.mxu0 %v638
  %674 = vmatprep.subr.mxu0 %v643
  %675 = vmatpush1.msra.mxu0 %v642
  %676 = vmatprep.subr.mxu0 %v647
  %677 = vmatpush1.msra.mxu0 %v646
  %678 = vmatprep.subr.mxu0 %v662
  %679 = vmatpush1.msra.mxu0 %v659
  %680 = vmatprep.subr.mxu0 0.0
  %681 = vmatpush1.msra.mxu0 0.0
  %682 = vmatprep.subr.mxu0 0.0
  %683 = vmatpush1.msra.mxu0 0.0
  %684 = vmatprep.subr.mxu0 0.0
  %685 = vmatpush1.msra.mxu0 0.0
  %686 = vmatprep.subr.mxu0 0.0
  %687 = vmatpush1.msra.mxu0 0.0
  %688 = vmatprep.subr.mxu0 0.0
  %689 = vmatpush1.msra.mxu0 0.0
  %690 = vmatprep.subr.mxu0 0.0
  %691 = vmatpush1.msra.mxu0 0.0
  %692 = vmatprep.subr.mxu0 0.0
  %693 = vmatpush1.msra.mxu0 0.0
  %694 = vmatprep.subr.mxu0 0.0
  %695 = vmatpush1.msra.mxu0 0.0
  %696 = vmatprep.subr.mxu0 0.0
  %697 = vmatpush1.msra.mxu0 0.0
  %698 = vmatprep.subr.mxu0 0.0
  %699 = vmatpush1.msra.mxu0 0.0
  %700 = vmatprep.subr.mxu0 0.0
  %701 = vmatpush1.msra.mxu0 0.0
  %702 = vmatprep.subr.mxu0 0.0
  %703 = vmatpush1.msra.mxu0 0.0
  %704 = vmatprep.subr.mxu0 0.0
  %705 = vmatpush1.msra.mxu0 0.0
  %706 = vmatprep.subr.mxu0 0.0
  %707 = vmatpush1.msra.mxu0 0.0
  %708 = vmatprep.subr.mxu0 0.0
  %709 = vmatpush1.msra.mxu0 0.0
  %710 = vmatprep.subr.mxu0 0.0
  %711 = vmatpush1.msra.mxu0 0.0
  %712 = vmatprep.subr.mxu0 0.0
  %713 = vmatpush1.msra.mxu0 0.0
  %714 = vmatprep.subr.mxu0 0.0
  %715 = vmatpush1.msra.mxu0 0.0
  %716 = vmatprep.subr.mxu0 0.0
  %717 = vmatpush1.msra.mxu0 0.0
  %718 = vmatprep.subr.mxu0 0.0
  %719 = vmatpush1.msra.mxu0 0.0
  %720 = vmatprep.subr.mxu0 0.0
  %721 = vmatpush1.msra.mxu0 0.0
  %722 = vmatprep.subr.mxu0 0.0
  %723 = vmatpush1.msra.mxu0 0.0
  %724 = vmatprep.subr.mxu0 0.0
  %725 = vmatpush1.msra.mxu0 0.0
  %726 = vmatprep.subr.mxu0 0.0
  %727 = vmatpush1.msra.mxu0 0.0
  %728 = vmatprep.subr.mxu0 0.0
  %729 = vmatpush1.msra.mxu0 0.0
  %730 = vmatprep.subr.mxu0 0.0
  %731 = vmatpush1.msra.mxu0 0.0
  %732 = vmatprep.subr.mxu0 0.0
  %733 = vmatpush1.msra.mxu0 0.0
  %734 = vmatprep.mubr.f32.mxu0 0.0
  %735 = vmatmul.mubr.f32.gmra.mrb[0].mxu0 %v656
  %v736 = vpop.f32.mrb[0].mxu0
  %v737 = vadd.f32 0.0, %v736
  %v738 = vpop.f32.mrb[0].mxu0
  %v739 = vadd.f32 0.0, %v738
  %740 = vdwg.mxu0
  %741 = vmatprep.subr.mxu0 %v637
  %742 = vmatpush1.msra.mxu0 %v636
  %743 = vmatprep.subr.mxu0 %v641
  %744 = vmatpush1.msra.mxu0 %v640
  %745 = vmatprep.subr.mxu0 %v645
  %746 = vmatpush1.msra.mxu0 %v644
  %747 = vmatprep.subr.mxu0 %v649
  %748 = vmatpush1.msra.mxu0 %v648
  %749 = vmatprep.subr.mxu0 %v668
  %750 = vmatpush1.msra.mxu0 %v665
  %751 = vmatprep.subr.mxu0 0.0
  %752 = vmatpush1.msra.mxu0 0.0
  %753 = vmatprep.subr.mxu0 0.0
  %754 = vmatpush1.msra.mxu0 0.0
  %755 = vmatprep.subr.mxu0 0.0
  %756 = vmatpush1.msra.mxu0 0.0
  %757 = vmatprep.subr.mxu0 0.0
  %758 = vmatpush1.msra.mxu0 0.0
  %759 = vmatprep.subr.mxu0 0.0
  %760 = vmatpush1.msra.mxu0 0.0
  %761 = vmatprep.subr.mxu0 0.0
  %762 = vmatpush1.msra.mxu0 0.0
  %763 = vmatprep.subr.mxu0 0.0
  %764 = vmatpush1.msra.mxu0 0.0
  %765 = vmatprep.subr.mxu0 0.0
  %766 = vmatpush1.msra.mxu0 0.0
  %767 = vmatprep.subr.mxu0 0.0
  %768 = vmatpush1.msra.mxu0 0.0
  %769 = vmatprep.subr.mxu0 0.0
  %770 = vmatpush1.msra.mxu0 0.0
  %771 = vmatprep.subr.mxu0 0.0
  %772 = vmatpush1.msra.mxu0 0.0
  %773 = vmatprep.subr.mxu0 0.0
  %774 = vmatpush1.msra.mxu0 0.0
  %775 = vmatprep.subr.mxu0 0.0
  %776 = vmatpush1.msra.mxu0 0.0
  %777 = vmatprep.subr.mxu0 0.0
  %778 = vmatpush1.msra.mxu0 0.0
  %779 = vmatprep.subr.mxu0 0.0
  %780 = vmatpush1.msra.mxu0 0.0
  %781 = vmatprep.subr.mxu0 0.0
  %782 = vmatpush1.msra.mxu0 0.0
  %783 = vmatprep.subr.mxu0 0.0
  %784 = vmatpush1.msra.mxu0 0.0
  %785 = vmatprep.subr.mxu0 0.0
  %786 = vmatpush1.msra.mxu0 0.0
  %787 = vmatprep.subr.mxu0 0.0
  %788 = vmatpush1.msra.mxu0 0.0
  %789 = vmatprep.subr.mxu0 0.0
  %790 = vmatpush1.msra.mxu0 0.0
  %791 = vmatprep.subr.mxu0 0.0
  %792 = vmatpush1.msra.mxu0 0.0
  %793 = vmatprep.subr.mxu0 0.0
  %794 = vmatpush1.msra.mxu0 0.0
  %795 = vmatprep.subr.mxu0 0.0
  %796 = vmatpush1.msra.mxu0 0.0
  %797 = vmatprep.subr.mxu0 0.0
  %798 = vmatpush1.msra.mxu0 0.0
  %799 = vmatprep.subr.mxu0 0.0
  %800 = vmatpush1.msra.mxu0 0.0
  %801 = vmatprep.subr.mxu0 0.0
  %802 = vmatpush1.msra.mxu0 0.0
  %803 = vmatprep.subr.mxu0 0.0
  %804 = vmatpush1.msra.mxu0 0.0
  %805 = vmatprep.mubr.f32.mxu0 0.0
  %806 = vmatmul.mubr.f32.gmra.mrb[0].mxu0 %v656
  %v807 = vpop.f32.mrb[0].mxu0
  %v808 = vadd.f32 0.0, %v807
  %v809 = vpop.f32.mrb[0].mxu0
  %v810 = vadd.f32 0.0, %v809
  %811 = vdwg.mxu0
  %v812 = vadd.f32 %v737, %v739
  %v813 = vadd.f32 %v812, %v808
  %v814 = vadd.f32 %v813, %v810
  %815 = vadd.xlane.f32.xlu0 %v814
  %v816 = vpop.xlane.xlu0 %815
  %v817 = vrcp.pop 512.0
  %v818 = vmul.f32 %v816, %v817
  %v819 = vsub.f32 %v737, %v818
  %v820 = vsub.f32 %v739, %v818
  %v821 = vsub.f32 %v808, %v818
  %v822 = vsub.f32 %v810, %v818
  %v823 = vmul.f32 %v819, %v819
  %v824 = vmul.f32 %v820, %v820
  %v825 = vmul.f32 %v821, %v821
  %v826 = vmul.f32 %v822, %v822
  %v827 = vadd.f32 %v823, %v824
  %v828 = vadd.f32 %v827, %v825
  %v829 = vadd.f32 %v828, %v826
  %830 = vadd.xlane.f32.xlu0 %v829
  %v831 = vpop.xlane.xlu0 %830
  %v832 = vmul.f32 %v831, %v817
  %v833 = vld [vmem:[%s4] sm:$0xff]
  %v834 = vadd.f32 %v832, 1e-05
  %v835 = vrsqrt.pop %v834
  %v836 = vmul.f32 %v833, %v835
  %v837 = vld [vmem:[%s5] sm:$0xff]
  %v838 = vmul.f32 %v818, %v836
  %v839 = vsub.f32 %v837, %v838
  %841 = vset.pattern.permute.xlu0 0
  %842 = vperm.xlu0 %841, %v836
  %v843 = vpop.permute.xlu0 %842
  %v845 = vmul.f32 %v737, %v843
  %v846 = vmul.f32 %v739, %v843
  %v847 = vmul.f32 %v808, %v843
  %v848 = vmul.f32 %v810, %v843
  %850 = vset.pattern.permute.xlu0 0
  %851 = vperm.xlu0 %850, %v839
  %v852 = vpop.permute.xlu0 %851
  %v854 = vadd.f32 %v845, %v852
  %v855 = vadd.f32 %v846, %v852
  %v856 = vadd.f32 %v847, %v852
  %v857 = vadd.f32 %v848, %v852
  %v858 = vmax.f32 %v854, 0.0
  %v859 = vmax.f32 %v855, 0.0
  %v860 = vmax.f32 %v856, 0.0
  %v861 = vmax.f32 %v857, 0.0
  %862 = vst [vmem:[#allocation4] sm:$0xff] 0.0
  %863 = vst [vmem:[#allocation4 + $0x8] sm:$0xff] 0.0
  %864 = vst [vmem:[#allocation4 + $0x10] sm:$0xff] 0.0
  %865 = vst [vmem:[#allocation4 + $0x18] sm:$0xff] 0.0
  %vm866 = vcmask 277504
  %867 = vst.msk [vmem:[#allocation4 + $0x20] sm:$0xff] %vm866, 0.0
  %872 = vrot.lane.b32.xlu0 %v858, 17
  %v873 = vpop.permute.xlu0 %872
  %874 = vrot.lane.b32.xlu0 %v859, 17
  %v875 = vpop.permute.xlu0 %874
  %876 = vrot.lane.b32.xlu0 %v860, 17
  %v877 = vpop.permute.xlu0 %876
  %878 = vrot.lane.b32.xlu0 %v861, 17
  %v879 = vpop.permute.xlu0 %878
  %v880 = vsel %vm48, %v873, %v875
  %v881 = vsel %vm48, %v875, %v877
  %v882 = vsel %vm48, %v877, %v879
  %vm888 = vcmask 1047688
  %889 = vst.msk [vmem:[#allocation4] sm:$0xff] %vm888, %v873
  %890 = vst [vmem:[#allocation4 + $0x8] sm:$0xff] %v880
  %891 = vst [vmem:[#allocation4 + $0x10] sm:$0xff] %v881
  %892 = vst [vmem:[#allocation4 + $0x18] sm:$0xff] %v882
  %893 = vst.msk [vmem:[#allocation4 + $0x20] sm:$0xff] %vm48, %v879
  %v894 = vld [vmem:[#allocation4] sm:$0xff]
  %v895 = vld [vmem:[#allocation4 + $0x8] sm:$0xff]
  %v896 = vld [vmem:[#allocation4 + $0x10] sm:$0xff]
  %v897 = vld [vmem:[#allocation4 + $0x18] sm:$0xff]
  %v898 = vsel %vm91, %v894, 0.0
  %v899 = vsel %vm92, %v895, 0.0
  %v900 = vsel %vm93, %v896, 0.0
  %v901 = vsel %vm94, %v897, 0.0
  %902 = vst [vmem:[#allocation5] sm:$0xff] %v898
  %903 = vst [vmem:[#allocation5 + $0x8] sm:$0xff] %v899
  %904 = vst [vmem:[#allocation5 + $0x10] sm:$0xff] %v900
  %905 = vst [vmem:[#allocation5 + $0x18] sm:$0xff] %v901
  %v906 = vld [vmem:[#allocation4] sm:$0xff]
  %v907 = vld [vmem:[#allocation4 + $0x8] sm:$0xff]
  %v908 = vld [vmem:[#allocation4 + $0x10] sm:$0xff]
  %v909 = vld [vmem:[#allocation4 + $0x18] sm:$0xff]
  %v910 = vld [vmem:[#allocation4 + $0x20] sm:$0xff]
  %916 = vrot.lane.b32.xlu0 %v906, 127
  %v917 = vpop.permute.xlu0 %916
  %918 = vrot.lane.b32.xlu0 %v907, 127
  %v919 = vpop.permute.xlu0 %918
  %920 = vrot.lane.b32.xlu0 %v908, 127
  %v921 = vpop.permute.xlu0 %920
  %922 = vrot.lane.b32.xlu0 %v909, 127
  %v923 = vpop.permute.xlu0 %922
  %924 = vrot.lane.b32.xlu0 %v910, 127
  %v925 = vpop.permute.xlu0 %924
  %v926 = vsel %vm152, %v917, %v919
  %v927 = vsel %vm152, %v919, %v921
  %v928 = vsel %vm152, %v921, %v923
  %v929 = vsel %vm152, %v923, %v925
  %v934 = vsel %vm133, %v926, 0.0
  %v935 = vsel %vm134, %v927, 0.0
  %v936 = vsel %vm135, %v928, 0.0
  %v937 = vsel %vm136, %v929, 0.0
  %938 = vst [vmem:[#allocation5 + $0x20] sm:$0xff] %v934
  %939 = vst [vmem:[#allocation5 + $0x28] sm:$0xff] %v935
  %940 = vst [vmem:[#allocation5 + $0x30] sm:$0xff] %v936
  %941 = vst [vmem:[#allocation5 + $0x38] sm:$0xff] %v937
  %v942 = vld [vmem:[#allocation4] sm:$0xff]
  %v943 = vld [vmem:[#allocation4 + $0x8] sm:$0xff]
  %v944 = vld [vmem:[#allocation4 + $0x10] sm:$0xff]
  %v945 = vld [vmem:[#allocation4 + $0x18] sm:$0xff]
  %v946 = vld [vmem:[#allocation4 + $0x20] sm:$0xff]
  %952 = vrot.lane.b32.xlu0 %v942, 126
  %v953 = vpop.permute.xlu0 %952
  %954 = vrot.lane.b32.xlu0 %v943, 126
  %v955 = vpop.permute.xlu0 %954
  %956 = vrot.lane.b32.xlu0 %v944, 126
  %v957 = vpop.permute.xlu0 %956
  %958 = vrot.lane.b32.xlu0 %v945, 126
  %v959 = vpop.permute.xlu0 %958
  %960 = vrot.lane.b32.xlu0 %v946, 126
  %v961 = vpop.permute.xlu0 %960
  %v962 = vsel %vm225, %v953, %v955
  %v963 = vsel %vm225, %v955, %v957
  %v964 = vsel %vm225, %v957, %v959
  %v965 = vsel %vm225, %v959, %v961
  %v970 = vsel %vm206, %v962, 0.0
  %v971 = vsel %vm207, %v963, 0.0
  %v972 = vsel %vm208, %v964, 0.0
  %v973 = vsel %vm209, %v965, 0.0
  %974 = vst [vmem:[#allocation5 + $0x40] sm:$0xff] %v970
  %975 = vst [vmem:[#allocation5 + $0x48] sm:$0xff] %v971
  %976 = vst [vmem:[#allocation5 + $0x50] sm:$0xff] %v972
  %977 = vst [vmem:[#allocation5 + $0x58] sm:$0xff] %v973
  %v978 = vld [vmem:[#allocation4] sm:$0xff]
  %v979 = vld [vmem:[#allocation4 + $0x8] sm:$0xff]
  %v980 = vld [vmem:[#allocation4 + $0x10] sm:$0xff]
  %v981 = vld [vmem:[#allocation4 + $0x18] sm:$0xff]
  %v982 = vld [vmem:[#allocation4 + $0x20] sm:$0xff]
  %988 = vrot.lane.b32.xlu0 %v978, 112
  %v989 = vpop.permute.xlu0 %988
  %990 = vrot.lane.b32.xlu0 %v979, 112
  %v991 = vpop.permute.xlu0 %990
  %992 = vrot.lane.b32.xlu0 %v980, 112
  %v993 = vpop.permute.xlu0 %992
  %994 = vrot.lane.b32.xlu0 %v981, 112
  %v995 = vpop.permute.xlu0 %994
  %996 = vrot.lane.b32.xlu0 %v982, 112
  %v997 = vpop.permute.xlu0 %996
  %v998 = vsel %vm286, %v989, %v991
  %v999 = vsel %vm286, %v991, %v993
  %v1000 = vsel %vm286, %v993, %v995
  %v1001 = vsel %vm286, %v995, %v997
  %v1006 = vsel %vm267, %v998, 0.0
  %v1007 = vsel %vm268, %v999, 0.0
  %v1008 = vsel %vm269, %v1000, 0.0
  %v1009 = vsel %vm270, %v1001, 0.0
  %1010 = vst [vmem:[#allocation5 + $0x60] sm:$0xff] %v1006
  %1011 = vst [vmem:[#allocation5 + $0x68] sm:$0xff] %v1007
  %1012 = vst [vmem:[#allocation5 + $0x70] sm:$0xff] %v1008
  %1013 = vst [vmem:[#allocation5 + $0x78] sm:$0xff] %v1009
  %v1014 = vld [vmem:[#allocation4] sm:$0xff]
  %v1015 = vld [vmem:[#allocation4 + $0x8] sm:$0xff]
  %v1016 = vld [vmem:[#allocation4 + $0x10] sm:$0xff]
  %v1017 = vld [vmem:[#allocation4 + $0x18] sm:$0xff]
  %v1018 = vld [vmem:[#allocation4 + $0x20] sm:$0xff]
  %1024 = vrot.lane.b32.xlu0 %v1014, 111
  %v1025 = vpop.permute.xlu0 %1024
  %1026 = vrot.lane.b32.xlu0 %v1015, 111
  %v1027 = vpop.permute.xlu0 %1026
  %1028 = vrot.lane.b32.xlu0 %v1016, 111
  %v1029 = vpop.permute.xlu0 %1028
  %1030 = vrot.lane.b32.xlu0 %v1017, 111
  %v1031 = vpop.permute.xlu0 %1030
  %1032 = vrot.lane.b32.xlu0 %v1018, 111
  %v1033 = vpop.permute.xlu0 %1032
  %v1034 = vsel %vm356, %v1025, %v1027
  %v1035 = vsel %vm356, %v1027, %v1029
  %v1036 = vsel %vm356, %v1029, %v1031
  %v1037 = vsel %vm356, %v1031, %v1033
  %v1042 = vsel %vm337, %v1034, 0.0
  %v1043 = vsel %vm338, %v1035, 0.0
  %v1044 = vsel %vm339, %v1036, 0.0
  %v1045 = vsel %vm340, %v1037, 0.0
  %1046 = vst [vmem:[#allocation5 + $0x80] sm:$0xff] %v1042
  %1047 = vst [vmem:[#allocation5 + $0x88] sm:$0xff] %v1043
  %1048 = vst [vmem:[#allocation5 + $0x90] sm:$0xff] %v1044
  %1049 = vst [vmem:[#allocation5 + $0x98] sm:$0xff] %v1045
  %v1050 = vld [vmem:[#allocation4] sm:$0xff]
  %v1051 = vld [vmem:[#allocation4 + $0x8] sm:$0xff]
  %v1052 = vld [vmem:[#allocation4 + $0x10] sm:$0xff]
  %v1053 = vld [vmem:[#allocation4 + $0x18] sm:$0xff]
  %v1054 = vld [vmem:[#allocation4 + $0x20] sm:$0xff]
  %1060 = vrot.lane.b32.xlu0 %v1050, 110
  %v1061 = vpop.permute.xlu0 %1060
  %1062 = vrot.lane.b32.xlu0 %v1051, 110
  %v1063 = vpop.permute.xlu0 %1062
  %1064 = vrot.lane.b32.xlu0 %v1052, 110
  %v1065 = vpop.permute.xlu0 %1064
  %1066 = vrot.lane.b32.xlu0 %v1053, 110
  %v1067 = vpop.permute.xlu0 %1066
  %1068 = vrot.lane.b32.xlu0 %v1054, 110
  %v1069 = vpop.permute.xlu0 %1068
  %v1070 = vsel %vm414, %v1061, %v1063
  %v1071 = vsel %vm414, %v1063, %v1065
  %v1072 = vsel %vm414, %v1065, %v1067
  %v1073 = vsel %vm414, %v1067, %v1069
  %v1078 = vsel %vm395, %v1070, 0.0
  %v1079 = vsel %vm396, %v1071, 0.0
  %v1080 = vsel %vm397, %v1072, 0.0
  %v1081 = vsel %vm398, %v1073, 0.0
  %1082 = vst [vmem:[#allocation5 + $0xa0] sm:$0xff] %v1078
  %1083 = vst [vmem:[#allocation5 + $0xa8] sm:$0xff] %v1079
  %1084 = vst [vmem:[#allocation5 + $0xb0] sm:$0xff] %v1080
  %1085 = vst [vmem:[#allocation5 + $0xb8] sm:$0xff] %v1081
  %v1086 = vld [vmem:[#allocation4] sm:$0xff]
  %v1087 = vld [vmem:[#allocation4 + $0x8] sm:$0xff]
  %v1088 = vld [vmem:[#allocation4 + $0x10] sm:$0xff]
  %v1089 = vld [vmem:[#allocation4 + $0x18] sm:$0xff]
  %v1090 = vld [vmem:[#allocation4 + $0x20] sm:$0xff]
  %1096 = vrot.lane.b32.xlu0 %v1086, 96
  %v1097 = vpop.permute.xlu0 %1096
  %1098 = vrot.lane.b32.xlu0 %v1087, 96
  %v1099 = vpop.permute.xlu0 %1098
  %1100 = vrot.lane.b32.xlu0 %v1088, 96
  %v1101 = vpop.permute.xlu0 %1100
  %1102 = vrot.lane.b32.xlu0 %v1089, 96
  %v1103 = vpop.permute.xlu0 %1102
  %1104 = vrot.lane.b32.xlu0 %v1090, 96
  %v1105 = vpop.permute.xlu0 %1104
  %v1106 = vsel %vm488, %v1097, %v1099
  %v1107 = vsel %vm488, %v1099, %v1101
  %v1108 = vsel %vm488, %v1101, %v1103
  %v1109 = vsel %vm488, %v1103, %v1105
  %v1114 = vsel %vm469, %v1106, 0.0
  %v1115 = vsel %vm470, %v1107, 0.0
  %v1116 = vsel %vm471, %v1108, 0.0
  %v1117 = vsel %vm472, %v1109, 0.0
  %1118 = vst [vmem:[#allocation5 + $0xc0] sm:$0xff] %v1114
  %1119 = vst [vmem:[#allocation5 + $0xc8] sm:$0xff] %v1115
  %1120 = vst [vmem:[#allocation5 + $0xd0] sm:$0xff] %v1116
  %1121 = vst [vmem:[#allocation5 + $0xd8] sm:$0xff] %v1117
  %v1122 = vld [vmem:[#allocation4] sm:$0xff]
  %v1123 = vld [vmem:[#allocation4 + $0x8] sm:$0xff]
  %v1124 = vld [vmem:[#allocation4 + $0x10] sm:$0xff]
  %v1125 = vld [vmem:[#allocation4 + $0x18] sm:$0xff]
  %v1126 = vld [vmem:[#allocation4 + $0x20] sm:$0xff]
  %1132 = vrot.lane.b32.xlu0 %v1122, 95
  %v1133 = vpop.permute.xlu0 %1132
  %1134 = vrot.lane.b32.xlu0 %v1123, 95
  %v1135 = vpop.permute.xlu0 %1134
  %1136 = vrot.lane.b32.xlu0 %v1124, 95
  %v1137 = vpop.permute.xlu0 %1136
  %1138 = vrot.lane.b32.xlu0 %v1125, 95
  %v1139 = vpop.permute.xlu0 %1138
  %1140 = vrot.lane.b32.xlu0 %v1126, 95
  %v1141 = vpop.permute.xlu0 %1140
  %v1142 = vsel %vm546, %v1133, %v1135
  %v1143 = vsel %vm546, %v1135, %v1137
  %v1144 = vsel %vm546, %v1137, %v1139
  %v1145 = vsel %vm546, %v1139, %v1141
  %v1150 = vsel %vm527, %v1142, 0.0
  %v1151 = vsel %vm528, %v1143, 0.0
  %v1152 = vsel %vm529, %v1144, 0.0
  %v1153 = vsel %vm530, %v1145, 0.0
  %1154 = vst [vmem:[#allocation5 + $0xe0] sm:$0xff] %v1150
  %1155 = vst [vmem:[#allocation5 + $0xe8] sm:$0xff] %v1151
  %1156 = vst [vmem:[#allocation5 + $0xf0] sm:$0xff] %v1152
  %1157 = vst [vmem:[#allocation5 + $0xf8] sm:$0xff] %v1153
  %v1158 = vld [vmem:[#allocation4] sm:$0xff]
  %v1159 = vld [vmem:[#allocation4 + $0x8] sm:$0xff]
  %v1160 = vld [vmem:[#allocation4 + $0x10] sm:$0xff]
  %v1161 = vld [vmem:[#allocation4 + $0x18] sm:$0xff]
  %v1162 = vld [vmem:[#allocation4 + $0x20] sm:$0xff]
  %1168 = vrot.lane.b32.xlu0 %v1158, 94
  %v1169 = vpop.permute.xlu0 %1168
  %1170 = vrot.lane.b32.xlu0 %v1159, 94
  %v1171 = vpop.permute.xlu0 %1170
  %1172 = vrot.lane.b32.xlu0 %v1160, 94
  %v1173 = vpop.permute.xlu0 %1172
  %1174 = vrot.lane.b32.xlu0 %v1161, 94
  %v1175 = vpop.permute.xlu0 %1174
  %1176 = vrot.lane.b32.xlu0 %v1162, 94
  %v1177 = vpop.permute.xlu0 %1176
  %v1178 = vsel %vm616, %v1169, %v1171
  %v1179 = vsel %vm616, %v1171, %v1173
  %v1180 = vsel %vm616, %v1173, %v1175
  %v1181 = vsel %vm616, %v1175, %v1177
  %v1186 = vsel %vm597, %v1178, 0.0
  %v1187 = vsel %vm598, %v1179, 0.0
  %v1188 = vsel %vm599, %v1180, 0.0
  %v1189 = vsel %vm600, %v1181, 0.0
  %1190 = vst [vmem:[#allocation5 + $0x100] sm:$0xff] %v1186
  %1191 = vst [vmem:[#allocation5 + $0x108] sm:$0xff] %v1187
  %1192 = vst [vmem:[#allocation5 + $0x110] sm:$0xff] %v1188
  %1193 = vst [vmem:[#allocation5 + $0x118] sm:$0xff] %v1189
  %v1194 = vld [vmem:[%s6] sm:$0xff]
  %v1195 = vld [vmem:[#allocation5] sm:$0xff]
  %v1196 = vld [vmem:[#allocation5 + $0x8] sm:$0xff]
  %v1197 = vld [vmem:[#allocation5 + $0x10] sm:$0xff]
  %v1198 = vld [vmem:[#allocation5 + $0x18] sm:$0xff]
  %v1199 = vld [vmem:[#allocation5 + $0x20] sm:$0xff]
  %v1200 = vld [vmem:[#allocation5 + $0x28] sm:$0xff]
  %v1201 = vld [vmem:[#allocation5 + $0x30] sm:$0xff]
  %v1202 = vld [vmem:[#allocation5 + $0x38] sm:$0xff]
  %v1203 = vld [vmem:[#allocation5 + $0x40] sm:$0xff]
  %v1204 = vld [vmem:[#allocation5 + $0x48] sm:$0xff]
  %v1205 = vld [vmem:[#allocation5 + $0x50] sm:$0xff]
  %v1206 = vld [vmem:[#allocation5 + $0x58] sm:$0xff]
  %v1207 = vld [vmem:[#allocation5 + $0x60] sm:$0xff]
  %v1208 = vld [vmem:[#allocation5 + $0x68] sm:$0xff]
  %v1209 = vld [vmem:[#allocation5 + $0x70] sm:$0xff]
  %v1210 = vld [vmem:[#allocation5 + $0x78] sm:$0xff]
  %v1211 = vld [vmem:[#allocation5 + $0x80] sm:$0xff]
  %v1212 = vld [vmem:[#allocation5 + $0x88] sm:$0xff]
  %v1213 = vld [vmem:[#allocation5 + $0x90] sm:$0xff]
  %v1214 = vld [vmem:[#allocation5 + $0x98] sm:$0xff]
  %v1215 = vld [vmem:[#allocation5 + $0xa0] sm:$0xff]
  %v1216 = vld [vmem:[#allocation5 + $0xa8] sm:$0xff]
  %v1217 = vld [vmem:[#allocation5 + $0xb0] sm:$0xff]
  %v1218 = vld [vmem:[#allocation5 + $0xb8] sm:$0xff]
  %v1219 = vld [vmem:[#allocation5 + $0xc0] sm:$0xff]
  %v1220 = vld [vmem:[#allocation5 + $0xc8] sm:$0xff]
  %v1221 = vld [vmem:[#allocation5 + $0xd0] sm:$0xff]
  %v1222 = vld [vmem:[#allocation5 + $0xd8] sm:$0xff]
  %v1223 = vld [vmem:[#allocation5 + $0xe0] sm:$0xff]
  %v1224 = vld [vmem:[#allocation5 + $0xe8] sm:$0xff]
  %v1225 = vld [vmem:[#allocation5 + $0xf0] sm:$0xff]
  %v1226 = vld [vmem:[#allocation5 + $0xf8] sm:$0xff]
  %v1227 = vld [vmem:[#allocation5 + $0x100] sm:$0xff]
  %v1228 = vld [vmem:[#allocation5 + $0x108] sm:$0xff]
  %v1229 = vld [vmem:[#allocation5 + $0x110] sm:$0xff]
  %v1230 = vld [vmem:[#allocation5 + $0x118] sm:$0xff]
  %vm1231 = vcmask 588800
  %v1233 = vsel %vm1231, %v1194, 0
  %1235 = vmatprep.subr.mxu0 %v1196
  %1236 = vmatpush1.msra.mxu0 %v1195
  %1237 = vmatprep.subr.mxu0 %v1200
  %1238 = vmatpush1.msra.mxu0 %v1199
  %1239 = vmatprep.subr.mxu0 %v1204
  %1240 = vmatpush1.msra.mxu0 %v1203
  %1241 = vmatprep.subr.mxu0 %v1208
  %1242 = vmatpush1.msra.mxu0 %v1207
  %1243 = vmatprep.subr.mxu0 %v1212
  %1244 = vmatpush1.msra.mxu0 %v1211
  %1245 = vmatprep.subr.mxu0 %v1216
  %1246 = vmatpush1.msra.mxu0 %v1215
  %1247 = vmatprep.subr.mxu0 %v1220
  %1248 = vmatpush1.msra.mxu0 %v1219
  %1249 = vmatprep.subr.mxu0 %v1224
  %1250 = vmatpush1.msra.mxu0 %v1223
  %1251 = vmatprep.subr.mxu0 %v1228
  %1252 = vmatpush1.msra.mxu0 %v1227
  %1253 = vmatprep.subr.mxu0 0.0
  %1254 = vmatpush1.msra.mxu0 0.0
  %1255 = vmatprep.subr.mxu0 0.0
  %1256 = vmatpush1.msra.mxu0 0.0
  %1257 = vmatprep.subr.mxu0 0.0
  %1258 = vmatpush1.msra.mxu0 0.0
  %1259 = vmatprep.subr.mxu0 0.0
  %1260 = vmatpush1.msra.mxu0 0.0
  %1261 = vmatprep.subr.mxu0 0.0
  %1262 = vmatpush1.msra.mxu0 0.0
  %1263 = vmatprep.subr.mxu0 0.0
  %1264 = vmatpush1.msra.mxu0 0.0
  %1265 = vmatprep.subr.mxu0 0.0
  %1266 = vmatpush1.msra.mxu0 0.0
  %1267 = vmatprep.subr.mxu0 0.0
  %1268 = vmatpush1.msra.mxu0 0.0
  %1269 = vmatprep.subr.mxu0 0.0
  %1270 = vmatpush1.msra.mxu0 0.0
  %1271 = vmatprep.subr.mxu0 0.0
  %1272 = vmatpush1.msra.mxu0 0.0
  %1273 = vmatprep.subr.mxu0 0.0
  %1274 = vmatpush1.msra.mxu0 0.0
  %1275 = vmatprep.subr.mxu0 0.0
  %1276 = vmatpush1.msra.mxu0 0.0
  %1277 = vmatprep.subr.mxu0 0.0
  %1278 = vmatpush1.msra.mxu0 0.0
  %1279 = vmatprep.subr.mxu0 0.0
  %1280 = vmatpush1.msra.mxu0 0.0
  %1281 = vmatprep.subr.mxu0 0.0
  %1282 = vmatpush1.msra.mxu0 0.0
  %1283 = vmatprep.subr.mxu0 0.0
  %1284 = vmatpush1.msra.mxu0 0.0
  %1285 = vmatprep.subr.mxu0 0.0
  %1286 = vmatpush1.msra.mxu0 0.0
  %1287 = vmatprep.subr.mxu0 0.0
  %1288 = vmatpush1.msra.mxu0 0.0
  %1289 = vmatprep.subr.mxu0 0.0
  %1290 = vmatpush1.msra.mxu0 0.0
  %1291 = vmatprep.subr.mxu0 0.0
  %1292 = vmatpush1.msra.mxu0 0.0
  %1293 = vmatprep.subr.mxu0 0.0
  %1294 = vmatpush1.msra.mxu0 0.0
  %1295 = vmatprep.subr.mxu0 0.0
  %1296 = vmatpush1.msra.mxu0 0.0
  %1297 = vmatprep.subr.mxu0 0.0
  %1298 = vmatpush1.msra.mxu0 0.0
  %1299 = vmatprep.mubr.f32.mxu0 0.0
  %1300 = vmatmul.mubr.f32.gmra.mrb[0].mxu0 %v1233
  %v1301 = vpop.f32.mrb[0].mxu0
  %v1302 = vadd.f32 0.0, %v1301
  %v1303 = vpop.f32.mrb[0].mxu0
  %v1304 = vadd.f32 0.0, %v1303
  %1305 = vdwg.mxu0
  %1306 = vmatprep.subr.mxu0 %v1198
  %1307 = vmatpush1.msra.mxu0 %v1197
  %1308 = vmatprep.subr.mxu0 %v1202
  %1309 = vmatpush1.msra.mxu0 %v1201
  %1310 = vmatprep.subr.mxu0 %v1206
  %1311 = vmatpush1.msra.mxu0 %v1205
  %1312 = vmatprep.subr.mxu0 %v1210
  %1313 = vmatpush1.msra.mxu0 %v1209
  %1314 = vmatprep.subr.mxu0 %v1214
  %1315 = vmatpush1.msra.mxu0 %v1213
  %1316 = vmatprep.subr.mxu0 %v1218
  %1317 = vmatpush1.msra.mxu0 %v1217
  %1318 = vmatprep.subr.mxu0 %v1222
  %1319 = vmatpush1.msra.mxu0 %v1221
  %1320 = vmatprep.subr.mxu0 %v1226
  %1321 = vmatpush1.msra.mxu0 %v1225
  %1322 = vmatprep.subr.mxu0 %v1230
  %1323 = vmatpush1.msra.mxu0 %v1229
  %1324 = vmatprep.subr.mxu0 0.0
  %1325 = vmatpush1.msra.mxu0 0.0
  %1326 = vmatprep.subr.mxu0 0.0
  %1327 = vmatpush1.msra.mxu0 0.0
  %1328 = vmatprep.subr.mxu0 0.0
  %1329 = vmatpush1.msra.mxu0 0.0
  %1330 = vmatprep.subr.mxu0 0.0
  %1331 = vmatpush1.msra.mxu0 0.0
  %1332 = vmatprep.subr.mxu0 0.0
  %1333 = vmatpush1.msra.mxu0 0.0
  %1334 = vmatprep.subr.mxu0 0.0
  %1335 = vmatpush1.msra.mxu0 0.0
  %1336 = vmatprep.subr.mxu0 0.0
  %1337 = vmatpush1.msra.mxu0 0.0
  %1338 = vmatprep.subr.mxu0 0.0
  %1339 = vmatpush1.msra.mxu0 0.0
  %1340 = vmatprep.subr.mxu0 0.0
  %1341 = vmatpush1.msra.mxu0 0.0
  %1342 = vmatprep.subr.mxu0 0.0
  %1343 = vmatpush1.msra.mxu0 0.0
  %1344 = vmatprep.subr.mxu0 0.0
  %1345 = vmatpush1.msra.mxu0 0.0
  %1346 = vmatprep.subr.mxu0 0.0
  %1347 = vmatpush1.msra.mxu0 0.0
  %1348 = vmatprep.subr.mxu0 0.0
  %1349 = vmatpush1.msra.mxu0 0.0
  %1350 = vmatprep.subr.mxu0 0.0
  %1351 = vmatpush1.msra.mxu0 0.0
  %1352 = vmatprep.subr.mxu0 0.0
  %1353 = vmatpush1.msra.mxu0 0.0
  %1354 = vmatprep.subr.mxu0 0.0
  %1355 = vmatpush1.msra.mxu0 0.0
  %1356 = vmatprep.subr.mxu0 0.0
  %1357 = vmatpush1.msra.mxu0 0.0
  %1358 = vmatprep.subr.mxu0 0.0
  %1359 = vmatpush1.msra.mxu0 0.0
  %1360 = vmatprep.subr.mxu0 0.0
  %1361 = vmatpush1.msra.mxu0 0.0
  %1362 = vmatprep.subr.mxu0 0.0
  %1363 = vmatpush1.msra.mxu0 0.0
  %1364 = vmatprep.subr.mxu0 0.0
  %1365 = vmatpush1.msra.mxu0 0.0
  %1366 = vmatprep.subr.mxu0 0.0
  %1367 = vmatpush1.msra.mxu0 0.0
  %1368 = vmatprep.subr.mxu0 0.0
  %1369 = vmatpush1.msra.mxu0 0.0
  %1370 = vmatprep.mubr.f32.mxu0 0.0
  %1371 = vmatmul.mubr.f32.gmra.mrb[0].mxu0 %v1233
  %v1372 = vpop.f32.mrb[0].mxu0
  %v1373 = vadd.f32 0.0, %v1372
  %v1374 = vpop.f32.mrb[0].mxu0
  %v1375 = vadd.f32 0.0, %v1374
  %1376 = vdwg.mxu0
  %v1377 = vadd.f32 %v1302, %v1304
  %v1378 = vadd.f32 %v1377, %v1373
  %v1379 = vadd.f32 %v1378, %v1375
  %1380 = vadd.xlane.f32.xlu0 %v1379
  %v1381 = vpop.xlane.xlu0 %1380
  %v1382 = vmul.f32 %v1381, %v817
  %v1383 = vsub.f32 %v1302, %v1382
  %v1384 = vsub.f32 %v1304, %v1382
  %v1385 = vsub.f32 %v1373, %v1382
  %v1386 = vsub.f32 %v1375, %v1382
  %v1387 = vmul.f32 %v1383, %v1383
  %v1388 = vmul.f32 %v1384, %v1384
  %v1389 = vmul.f32 %v1385, %v1385
  %v1390 = vmul.f32 %v1386, %v1386
  %v1391 = vadd.f32 %v1387, %v1388
  %v1392 = vadd.f32 %v1391, %v1389
  %v1393 = vadd.f32 %v1392, %v1390
  %1394 = vadd.xlane.f32.xlu0 %v1393
  %v1395 = vpop.xlane.xlu0 %1394
  %v1396 = vmul.f32 %v1395, %v817
  %v1397 = vld [vmem:[%s7] sm:$0xff]
  %v1398 = vadd.f32 %v1396, 1e-05
  %v1399 = vrsqrt.pop %v1398
  %v1400 = vmul.f32 %v1397, %v1399
  %v1401 = vld [vmem:[%s8] sm:$0xff]
  %v1402 = vmul.f32 %v1382, %v1400
  %v1403 = vsub.f32 %v1401, %v1402
  %1405 = vset.pattern.permute.xlu0 0
  %1406 = vperm.xlu0 %1405, %v1400
  %v1407 = vpop.permute.xlu0 %1406
  %v1409 = vmul.f32 %v1302, %v1407
  %v1410 = vmul.f32 %v1304, %v1407
  %v1411 = vmul.f32 %v1373, %v1407
  %v1412 = vmul.f32 %v1375, %v1407
  %1414 = vset.pattern.permute.xlu0 0
  %1415 = vperm.xlu0 %1414, %v1403
  %v1416 = vpop.permute.xlu0 %1415
  %v1418 = vadd.f32 %v1409, %v1416
  %v1419 = vadd.f32 %v1410, %v1416
  %v1420 = vadd.f32 %v1411, %v1416
  %v1421 = vadd.f32 %v1412, %v1416
  %v1422 = vmax.f32 %v1418, 0.0
  %v1423 = vmax.f32 %v1419, 0.0
  %v1424 = vmax.f32 %v1420, 0.0
  %v1425 = vmax.f32 %v1421, 0.0
  %1426 = vst [vmem:[%s9] sm:$0xff] %v1422
  %1427 = vst [vmem:[%s9 + $0x8] sm:$0xff] %v1423
  %1428 = vst [vmem:[%s9 + $0x10] sm:$0xff] %v1424
  %1429 = vst [vmem:[%s9 + $0x18] sm:$0xff] %v1425
  // Predicated region
  $region38: #{double_conv_forward.1} parent=0 // pred_check
    _
  $region39: #{double_conv_forward.1} parent=0 // pred_check_branch
    %1431 = sbr.rel (0) target = $region41
  $region40: #{double_conv_forward.1} parent=0 // pred_region
    _
  $region41: #{double_conv_forward.1} parent=0 // pred_fallthru
    _
  // Predicated region
  $region42: #{double_conv_forward.1} parent=0 // pred_check
    _
  $region43: #{double_conv_forward.1} parent=0 // pred_check_branch
    %1433 = sbr.rel (0) target = $region45
  $region44: #{double_conv_forward.1} parent=0 // pred_region
    _
  $region45: #{double_conv_forward.1} parent=0 // pred_fallthru
    _

</llo_original>
